<compile_context>
chip_gen: v6e
topology: v6e:2x2x1
jax: 0.10.0
libtpu: 0.0.40
codegen_flags: <defaults>
</compile_context>

<pallas_src>
import functools

import jax
import jax.numpy as jnp
import numpy as np
from jax import lax
from jax.experimental import pallas as pl
from jax.experimental.pallas import tpu as pltpu


# ----------------------------------------------------------------------------
# helpers
# ----------------------------------------------------------------------------
def _round_up(x, m):
    return ((x + m - 1) // m) * m


def _default_vmem_limit():
    """Generation-aware scoped VMEM limit (v7x: 64 MiB phys, v5e/v6e: 128 MiB)."""
    try:
        phys = int(pltpu.get_tpu_info().vmem_capacity_bytes)
    except Exception:
        phys = 64 * 1024 * 1024
    return int(max(32 * 1024 * 1024, min(phys * 3 // 4, 96 * 1024 * 1024)))


def _choose_tile_s(s_pad, rows, dtype_bytes, target_bytes):
    """Largest multiple-of-128 divisor of s_pad whose (rows x tile) block fits the budget."""
    m = s_pad // 128
    best = 128
    for d in range(1, m + 1):
        if m % d == 0 and d * 128 * rows * dtype_bytes <= target_bytes:
            best = d * 128
    return best


# ----------------------------------------------------------------------------
# fused Pallas kernel
# ----------------------------------------------------------------------------
def _coclr_fused_kernel(
        # scalar prefetch (SMEM)
        topk_ref, vsrc_ref,
        # inputs
        x_ref, wb_ref, bb_ref, w1_ref, b1_ref, w2_ref, b2_ref,
        queue_ref, qsec_ref, vname_ref, emat_ref, pmask_ref,
        # outputs
        logits_ref, mask_ref,
        # scratch
        acc_ref,
        *, B, C, K, n_chunks, inv_S, inv_T, topk_max):
    s = pl.program_id(0)

    @pl.when(s == 0)
    def _():
        acc_ref[...] = jnp.zeros_like(acc_ref)

    # ---- AdaptiveAvgPool3d((1,1,1)): lane-dense running sum (pure VPU per step) ----
    acc = acc_ref[...]
    if n_chunks <= 16:
        for c in range(n_chunks):                      # static unroll of 128-lane chunks
            acc = acc + x_ref[:, c * 128:(c + 1) * 128].astype(jnp.float32)
    else:
        def chunk_body(ci, a):
            off = pl.multiple_of(ci * 128, 128)
            return a + x_ref[:, pl.ds(off, 128)].astype(jnp.float32)
        acc = lax.fori_loop(0, n_chunks, chunk_body, acc)
    acc_ref[...] = acc

    @pl.when(s == pl.num_programs(0) - 1)
    def _():
        # One cross-lane reduce (epilogue only); two tiny matmuls against constant
        # selection matrices map the (3*B*C, 1) row-sum column onto the (3*B, C)
        # pooled layout without any in-kernel reshape/transpose.
        rowsum = jnp.sum(acc_ref[...], axis=1, keepdims=True)              # (3BC, 1)
        d = pmask_ref[...] * rowsum                                        # (3BC, C)
        pooled = jnp.dot(emat_ref[...], d,
                         preferred_element_type=jnp.float32) * inv_S       # (3B, C)

        # ---- three encoder heads (q / k / sampler) on the pooled features ----
        # TODO(synk): the real s3d backbone (select_backbone) is unavailable; a
        # deterministic 1x1x1-conv stand-in (matmul) replaces it.
        feats = []
        for e in range(3):                                                 # static unroll
            p = pooled[e * B:(e + 1) * B, :]                               # (B, C)
            feat = jnp.dot(p, wb_ref[e],
                           preferred_element_type=jnp.float32) + bb_ref[e]
            h = jnp.maximum(jnp.dot(feat, w1_ref[e],
                                    preferred_element_type=jnp.float32) + b1_ref[e], 0.0)
            z = jnp.dot(h, w2_ref[e],
                        preferred_element_type=jnp.float32) + b2_ref[e]
            nrm = jnp.sqrt(jnp.sum(z * z, axis=1, keepdims=True))
            feats.append(z / jnp.maximum(nrm, 1e-12))                      # F.normalize(dim=1)
        q, k, kf = feats

        LP = logits_ref.shape[1]
        col = lax.broadcasted_iota(jnp.int32, (B, LP), 1)

        # ---- logits: col 0 = l_pos, cols 1..K = l_neg (queue pre-padded, col 0 == 0) ----
        l_pos = jnp.sum(q * k, axis=1, keepdims=True)                      # einsum('nc,nc->n')
        l_all = jnp.dot(q, queue_ref[...],
                        preferred_element_type=jnp.float32)                # (B, LP)
        logits_ref[...] = (l_all + jnp.where(col == 0, l_pos, 0.0)) * inv_T

        # ---- mask: col 0 forced True, cols 1..K = mask_source | topk ----
        valid = jnp.logical_and(col >= 1, col <= K)
        row = lax.broadcasted_iota(jnp.int32, (B, LP), 0)
        vsrc = jnp.zeros((B, LP), jnp.int32)
        for b in range(B):                                                 # k_vsource from SMEM
            vsrc = jnp.where(row == b, vsrc_ref[b], vsrc)
        msrc = jnp.logical_and(vname_ref[...] == vsrc, valid)
        keep = jnp.logical_and(valid, jnp.logical_not(msrc))

        # torch.topk via iterative knock-out of the row max; membership is recovered at
        # the end from the knocked-out entries, so no extra (B, LP) mask carry stays live.
        neg_inf = jnp.float32(-jnp.inf)
        simw = jnp.where(keep,
                         jnp.dot(kf, qsec_ref[...],
                                 preferred_element_type=jnp.float32), neg_inf)
        n_topk = topk_ref[0]                                               # 0 while queue not full
        for i in range(topk_max):                                          # static unroll
            row_max = jnp.max(simw, axis=1, keepdims=True)
            first = jnp.min(jnp.where(simw == row_max, col, LP), axis=1, keepdims=True)
            sel = jnp.logical_and(col == first, i < n_topk)
            simw = jnp.where(sel, neg_inf, simw)
        topk_mask = jnp.logical_and(simw == neg_inf, keep)

        mask_full = jnp.logical_or(msrc, topk_mask)
        mask_ref[...] = jnp.where(col == 0, jnp.int32(1), mask_full.astype(jnp.int32))


# ----------------------------------------------------------------------------
# CoCLR wrapper (parameter setup + glue in plain JAX)
# ----------------------------------------------------------------------------
class CoCLRPallas:
    def __init__(self, in_channels=4, feature_size=32, dim=16, K=64,
                 m=0.999, T=0.07, topk=3, reverse=False,
                 stream_dtype=jnp.bfloat16, key=None):
        self.dim, self.K, self.m, self.T = dim, K, m, T
        self.topk, self.reverse = topk, reverse
        self.in_channels, self.feature_size = in_channels, feature_size
        self.stream_dtype = stream_dtype
        if key is None:
            key = jax.random.PRNGKey(0)
        ks = jax.random.split(key, 12)

        def mk(kw, kb, fan_in, fan_out):
            w = jax.random.normal(kw, (fan_in, fan_out), jnp.float32) / np.sqrt(fan_in)
            b = jax.random.normal(kb, (1, fan_out), jnp.float32) * 0.01
            return w, b

        wb, bb = mk(ks[0], ks[1], in_channels, feature_size)
        w1, b1 = mk(ks[2], ks[3], feature_size, feature_size)
        w2, b2 = mk(ks[4], ks[5], feature_size, dim)
        self.q_params = (wb, bb, w1, b1, w2, b2)
        self.k_params = self.q_params          # encoder_k initialized as a copy of encoder_q
        swb, sbb = mk(ks[6], ks[7], in_channels, feature_size)
        sw1, sb1 = mk(ks[8], ks[9], feature_size, feature_size)
        sw2, sb2 = mk(ks[10], ks[11], feature_size, dim)
        self.s_params = (swb, sbb, sw1, sb1, sw2, sb2)

        # Stacked (3, ...) parameters: encoder order (q, k, sampler).
        def stack(i):
            return jnp.stack([self.q_params[i], self.k_params[i], self.s_params[i]], axis=0)
        self.wb_s, self.bb_s = stack(0), stack(1)
        self.w1_s, self.b1_s = stack(2), stack(3)
        self.w2_s, self.b2_s = stack(4), stack(5)

        kq0, kq1 = jax.random.split(jax.random.PRNGKey(1), 2)
        q0 = jax.random.normal(kq0, (dim, K), jnp.float32)
        self.queue = q0 / jnp.linalg.norm(q0, axis=0, keepdims=True)
        q1 = jax.random.normal(kq1, (dim, K), jnp.float32)
        self.queue_second = q1 / jnp.linalg.norm(q1, axis=0, keepdims=True)
        self.queue_vname = jnp.arange(K, dtype=jnp.int32) % 10
        # Torch init is -1 (queue not full); set to 1 here so the top-k branch is exercised.
        self.queue_label = jnp.ones((K,), jnp.int32)

        self.LP = _round_up(1 + K, 128)        # lane-dense padded logits/mask width

    def forward(self, block1, block2, k_vsource):
        B, N = block1.shape[0], block1.shape[1]
        assert N == 2
        x1, f1 = block1[:, 0], block1[:, 1]
        x2, f2 = block2[:, 0], block2[:, 1]
        if self.reverse:
            x1, f1 = f1, x1
            x2, f2 = f2, x2

        # TODO(synk): DDP batch shuffle/unshuffle (concat_all_gather), momentum update of
        # encoder_k, and queue dequeue/enqueue are distributed / stateful training-time ops;
        # skipped in this single-device eval forward.

        C = x1.shape[1]
        S = int(np.prod(x1.shape[2:]))
        R = 3 * B * C
        K, LP, dim = self.K, self.LP, self.dim

        # Stream layout: (3*B*C, S) -- fully (8,128)-dense tiles, bf16 stream with f32
        # accumulation in-kernel.  Zero-pad S to a lane multiple (zeros don't affect the
        # sum; the kernel divides by the true S).
        s_pad = _round_up(S, 128)
        xs = jnp.stack([x1, x2, f2], axis=0).reshape(R, S).astype(self.stream_dtype)
        if s_pad != S:
            xs = jnp.pad(xs, ((0, 0), (0, s_pad - S)))

        dtype_bytes = jnp.dtype(self.stream_dtype).itemsize
        vmem_limit = _default_vmem_limit()
        # Multi-MiB x blocks amortize the ~0.35us/step pipeline overhead while keeping the
        # double-buffered stream + constants + scratch inside the per-generation budget.
        target_block_bytes = min(8 * 1024 * 1024, vmem_limit // 6)
        tile_s = _choose_tile_s(s_pad, R, dtype_bytes, target_block_bytes)
        n_tiles = s_pad // tile_s
        n_chunks = tile_s // 128

        # Lane-dense padded queues: column 0 reserved (l_pos / forced-True mask col).
        # TODO(synk): for production K (2048+) on v7x, keep these in pl.ANY and DMA them
        # only inside the last-step epilogue to save resident VMEM.
        queue_pad = jnp.zeros((dim, LP), jnp.float32).at[:, 1:1 + K].set(self.queue)
        qsec_pad = jnp.zeros((dim, LP), jnp.float32).at[:, 1:1 + K].set(self.queue_second)
        vname_pad = jnp.full((1, LP), -1, jnp.int32).at[0, 1:1 + K].set(self.queue_vname)

        # Constant selection matrices mapping the (R, 1) row-sum column to (3B, C) pooled.
        emat = jnp.asarray((np.arange(R)[None, :] // C) == np.arange(3 * B)[:, None],
                           jnp.float32)                                   # (3B, R)
        pmask = jnp.asarray((np.arange(R)[:, None] % C) == np.arange(C)[None, :],
                            jnp.float32)                                  # (R, C)

        # Scalar prefetch (SMEM): effective top-k (0 while queue not full -- no host sync,
        # no recompile when the queue fills) and the per-sample video source ids.
        topk_eff = (jnp.all(self.queue_label != -1).astype(jnp.int32)
                    * jnp.int32(self.topk)).reshape(1)
        vsrc = k_vsource.astype(jnp.int32).reshape(B)

        kern = functools.partial(
            _coclr_fused_kernel, B=B, C=C, K=K, n_chunks=n_chunks,
            inv_S=float(1.0 / S), inv_T=float(1.0 / self.T), topk_max=int(self.topk))

        grid_spec = pltpu.PrefetchScalarGridSpec(
            num_scalar_prefetch=2,
            grid=(n_tiles,),
            in_specs=[
                pl.BlockSpec((R, tile_s), lambda s, *_: (0, s)),          # x stream, S-tiled
                pl.BlockSpec(self.wb_s.shape, lambda s, *_: (0, 0, 0)),
                pl.BlockSpec(self.bb_s.shape, lambda s, *_: (0, 0, 0)),
                pl.BlockSpec(self.w1_s.shape, lambda s, *_: (0, 0, 0)),
                pl.BlockSpec(self.b1_s.shape, lambda s, *_: (0, 0, 0)),
                pl.BlockSpec(self.w2_s.shape, lambda s, *_: (0, 0, 0)),
                pl.BlockSpec(self.b2_s.shape, lambda s, *_: (0, 0, 0)),
                pl.BlockSpec((dim, LP), lambda s, *_: (0, 0)),            # queue (padded)
                pl.BlockSpec((dim, LP), lambda s, *_: (0, 0)),            # queue_second (padded)
                pl.BlockSpec((1, LP), lambda s, *_: (0, 0)),              # queue_vname (padded)
                pl.BlockSpec((3 * B, R), lambda s, *_: (0, 0)),           # emat
                pl.BlockSpec((R, C), lambda s, *_: (0, 0)),               # pmask
            ],
            out_specs=(pl.BlockSpec((B, LP), lambda s, *_: (0, 0)),
                       pl.BlockSpec((B, LP), lambda s, *_: (0, 0))),
            scratch_shapes=[pltpu.VMEM((R, 128), jnp.float32)],           # lane-dense running sum
        )

        # TODO(synk): on v7x (2 TensorCores) split the S reduction across cores with a
        # leading core-parallel grid axis + a partial-sum combine; the single 'arbitrary'
        # reduction axis keeps one TC idle there.
        logits_pad, mask_pad = pl.pallas_call(
            kern,
            grid_spec=grid_spec,
            out_shape=(jax.ShapeDtypeStruct((B, LP), jnp.float32),
                       jax.ShapeDtypeStruct((B, LP), jnp.int32)),
            compiler_params=pltpu.CompilerParams(
                dimension_semantics=("arbitrary",),                       # S axis is a reduction
                vmem_limit_bytes=vmem_limit),
        )(topk_eff, vsrc, xs, self.wb_s, self.bb_s, self.w1_s, self.b1_s,
          self.w2_s, self.b2_s, queue_pad, qsec_pad, vname_pad, emat, pmask)

        logits = logits_pad[:, :1 + K]
        mask = mask_pad[:, :1 + K] > 0
        return logits, mask


# ----------------------------------------------------------------------------
# Pure-JAX reference (correctness check; assumes reverse=False and a full queue,
# matching the demo configuration; pools over the same bf16-cast stream the
# kernel consumes, with f32 math everywhere downstream).
# ----------------------------------------------------------------------------
def _ref_encode(x, params, stream_dtype):
    wb, bb, w1, b1, w2, b2 = params
    xb = x.reshape(x.shape[0], x.shape[1], -1).astype(stream_dtype).astype(jnp.float32)
    pooled = xb.mean(-1)
    feat = pooled @ wb + bb
    h = jnp.maximum(feat @ w1 + b1, 0.0)
    z = h @ w2 + b2
    return z / jnp.maximum(jnp.linalg.norm(z, axis=1, keepdims=True), 1e-12)


def _ref_forward(model, block1, block2, k_vsource):
    B = block1.shape[0]
    x1, f2 = block1[:, 0], block2[:, 1]
    x2 = block2[:, 0]
    sd = model.stream_dtype
    q = _ref_encode(x1, model.q_params, sd)
    k = _ref_encode(x2, model.k_params, sd)
    kf = _ref_encode(f2, model.s_params, sd)
    l_pos = jnp.sum(q * k, axis=1, keepdims=True)
    l_neg = q @ model.queue
    logits = jnp.concatenate([l_pos, l_neg], axis=1) / model.T
    mask_source = k_vsource[:, None] == model.queue_vname[None, :]
    sim = jnp.where(mask_source, -jnp.inf, kf @ model.queue_second)
    _, idx = jax.lax.top_k(sim, model.topk)
    onehot = jnp.zeros_like(sim).at[jnp.arange(B)[:, None], idx].set(1.0)
    mask = mask_source | (onehot > 0)
    mask = jnp.concatenate([jnp.ones((B, 1), dtype=bool), mask], axis=1)
    return logits, mask


# ----------------------------------------------------------------------------
if __name__ == "__main__":
    B, C, T, H, W = 2, 4, 4, 8, 8
    DIM, K, FEAT, TOPK = 16, 64, 32, 3

    root = jax.random.PRNGKey(0)
    k1, k2, kp = jax.random.split(root, 3)
    block1 = jax.random.normal(k1, (B, 2, C, T, H, W), jnp.float32)
    block2 = jax.random.normal(k2, (B, 2, C, T, H, W), jnp.float32)
    k_vsource = jnp.array([3, 7], dtype=jnp.int32)

    model = CoCLRPallas(in_channels=C, feature_size=FEAT, dim=DIM, K=K,
                        T=0.07, topk=TOPK, reverse=False, key=kp)

    logits, mask = model.forward(block1, block2, k_vsource)
    jax.block_until_ready((logits, mask))

    logits_ref, mask_ref = _ref_forward(model, block1, block2, k_vsource)
    np.testing.assert_allclose(np.asarray(logits), np.asarray(logits_ref),
                               rtol=1e-4, atol=1e-3)
    assert np.array_equal(np.asarray(mask), np.asarray(mask_ref))
    assert logits.shape == (B, 1 + K) and mask.shape == (B, 1 + K)

    print("KERNEL_OK")
</pallas_src>

<mosaic_0001>
module attributes {stable_mosaic.version = 11 : i64} {
  func.func @_coclr_fused_kernel(%arg0: i32, %arg1: memref<1xi32, #tpu.memory_space<smem>>, %arg2: memref<2xi32, #tpu.memory_space<smem>>, %arg3: memref<24x256xbf16, #tpu.memory_space<vmem>>, %arg4: memref<3x4x32xf32, #tpu.memory_space<vmem>>, %arg5: memref<3x1x32xf32, #tpu.memory_space<vmem>>, %arg6: memref<3x32x32xf32, #tpu.memory_space<vmem>>, %arg7: memref<3x1x32xf32, #tpu.memory_space<vmem>>, %arg8: memref<3x32x16xf32, #tpu.memory_space<vmem>>, %arg9: memref<3x1x16xf32, #tpu.memory_space<vmem>>, %arg10: memref<16x128xf32, #tpu.memory_space<vmem>>, %arg11: memref<16x128xf32, #tpu.memory_space<vmem>>, %arg12: memref<1x128xi32, #tpu.memory_space<vmem>>, %arg13: memref<6x24xf32, #tpu.memory_space<vmem>>, %arg14: memref<24x4xf32, #tpu.memory_space<vmem>>, %arg15: memref<2x128xf32, #tpu.memory_space<vmem>>, %arg16: memref<2x128xi32, #tpu.memory_space<vmem>>, %arg17: memref<24x128xf32, #tpu.memory_space<vmem>>) attributes {dimension_semantics = [#tpu.dimension_semantics<arbitrary>], iteration_bounds = array<i64: 1>, scalar_prefetch = 2 : i64, scratch_operands = 1 : i64, tpu.core_type = #tpu.core_type<tc>, window_params = [{transform_indices = @transform_0, window_bounds = array<i64: 24, 256>}, {pipeline_mode = #tpu.pipeline_mode<synchronous>, transform_indices = @transform_1, window_bounds = array<i64: 3, 4, 32>}, {pipeline_mode = #tpu.pipeline_mode<synchronous>, transform_indices = @transform_2, window_bounds = array<i64: 3, 1, 32>}, {pipeline_mode = #tpu.pipeline_mode<synchronous>, transform_indices = @transform_3, window_bounds = array<i64: 3, 32, 32>}, {pipeline_mode = #tpu.pipeline_mode<synchronous>, transform_indices = @transform_4, window_bounds = array<i64: 3, 1, 32>}, {pipeline_mode = #tpu.pipeline_mode<synchronous>, transform_indices = @transform_5, window_bounds = array<i64: 3, 32, 16>}, {pipeline_mode = #tpu.pipeline_mode<synchronous>, transform_indices = @transform_6, window_bounds = array<i64: 3, 1, 16>}, {pipeline_mode = #tpu.pipeline_mode<synchronous>, transform_indices = @transform_7, window_bounds = array<i64: 16, 128>}, {pipeline_mode = #tpu.pipeline_mode<synchronous>, transform_indices = @transform_8, window_bounds = array<i64: 16, 128>}, {pipeline_mode = #tpu.pipeline_mode<synchronous>, transform_indices = @transform_9, window_bounds = array<i64: 1, 128>}, {pipeline_mode = #tpu.pipeline_mode<synchronous>, transform_indices = @transform_10, window_bounds = array<i64: 6, 24>}, {pipeline_mode = #tpu.pipeline_mode<synchronous>, transform_indices = @transform_11, window_bounds = array<i64: 24, 4>}, {pipeline_mode = #tpu.pipeline_mode<synchronous>, transform_indices = @transform_12, window_bounds = array<i64: 2, 128>}, {pipeline_mode = #tpu.pipeline_mode<synchronous>, transform_indices = @transform_13, window_bounds = array<i64: 2, 128>}]} {
    %c0_i32 = arith.constant 0 : i32
    %0 = arith.cmpi eq, %arg0, %c0_i32 : i32
    %1 = arith.extui %0 : i1 to i32
    %c0_i32_0 = arith.constant 0 : i32
    %2 = arith.cmpi ne, %1, %c0_i32_0 : i32
    scf.if %2 {
      %cst = arith.constant 0.000000e+00 : f32
      %14 = vector.broadcast %cst : f32 to vector<24x128xf32>
      %c0_9 = arith.constant 0 : index
      %c0_10 = arith.constant 0 : index
      %15 = vector.load %arg17[%c0_9, %c0_10] : memref<24x128xf32, #tpu.memory_space<vmem>>, vector<24x128xf32>
      tpu.vector_store %arg17[%c0_9, %c0_10], %14 {strides = array<i32>} : memref<24x128xf32, #tpu.memory_space<vmem>>, vector<24x128xf32>,
    } else {
    }
    %c0 = arith.constant 0 : index
    %c0_1 = arith.constant 0 : index
    %3 = vector.load %arg17[%c0, %c0_1] : memref<24x128xf32, #tpu.memory_space<vmem>>, vector<24x128xf32>
    %c0_2 = arith.constant 0 : index
    %c0_3 = arith.constant 0 : index
    %4 = vector.load %arg3[%c0_2, %c0_3] : memref<24x256xbf16, #tpu.memory_space<vmem>>, vector<24x128xbf16>
    %5 = arith.extf %4 : vector<24x128xbf16> to vector<24x128xf32>
    %6 = arith.addf %3, %5 : vector<24x128xf32>
    %c0_4 = arith.constant 0 : index
    %c128 = arith.constant 128 : index
    %7 = vector.load %arg3[%c0_4, %c128] : memref<24x256xbf16, #tpu.memory_space<vmem>>, vector<24x128xbf16>
    %8 = arith.extf %7 : vector<24x128xbf16> to vector<24x128xf32>
    %9 = arith.addf %6, %8 : vector<24x128xf32>
    %c0_5 = arith.constant 0 : index
    %c0_6 = arith.constant 0 : index
    %10 = vector.load %arg17[%c0_5, %c0_6] : memref<24x128xf32, #tpu.memory_space<vmem>>, vector<24x128xf32>
    tpu.vector_store %arg17[%c0_5, %c0_6], %9 {strides = array<i32>} : memref<24x128xf32, #tpu.memory_space<vmem>>, vector<24x128xf32>,
    %c0_i32_7 = arith.constant 0 : i32
    %11 = arith.cmpi eq, %arg0, %c0_i32_7 : i32
    %12 = arith.extui %11 : i1 to i32
    %c0_i32_8 = arith.constant 0 : i32
    %13 = arith.cmpi ne, %12, %c0_i32_8 : i32
    scf.if %13 {
      %c0_9 = arith.constant 0 : index
      %c0_10 = arith.constant 0 : index
      %14 = vector.load %arg17[%c0_9, %c0_10] : memref<24x128xf32, #tpu.memory_space<vmem>>, vector<24x128xf32>
      %cst = arith.constant dense<0.000000e+00> : vector<24xf32>
      %15 = vector.multi_reduction <add>, %14, %cst [1] : vector<24x128xf32> to vector<24xf32>
      %16 = vector.shape_cast %15 : vector<24xf32> to vector<24x1xf32>
      %c0_11 = arith.constant 0 : index
      %c0_12 = arith.constant 0 : index
      %17 = vector.load %arg14[%c0_11, %c0_12] : memref<24x4xf32, #tpu.memory_space<vmem>>, vector<24x4xf32>
      %18 = vector.broadcast %16 : vector<24x1xf32> to vector<24x4xf32>
      %19 = arith.mulf %17, %18 : vector<24x4xf32>
      %c0_13 = arith.constant 0 : index
      %c0_14 = arith.constant 0 : index
      %20 = vector.load %arg13[%c0_13, %c0_14] : memref<6x24xf32, #tpu.memory_space<vmem>>, vector<6x24xf32>
      %cst_15 = arith.constant dense<0.000000e+00> : vector<6x4xf32>
      %21 = tpu.matmul %20, %19, %cst_15 {dimension_numbers = #tpu.dot_dimension_numbers<[1], [0], [0], [1], [0, 0, 1, 1], [], []>} : vector<6x24xf32>, vector<24x4xf32>, vector<6x4xf32> -> vector<6x4xf32>
      %cst_16 = arith.constant 3.906250e-03 : f32
      %22 = vector.broadcast %cst_16 : f32 to vector<6x4xf32>
      %23 = arith.mulf %21, %22 : vector<6x4xf32>
      %24 = vector.extract_strided_slice %23 {offsets = [0, 0], sizes = [2, 4], strides = [1, 1]} : vector<6x4xf32> to vector<2x4xf32>
      %c0_17 = arith.constant 0 : index
      %c0_18 = arith.constant 0 : index
      %c0_19 = arith.constant 0 : index
      %25 = vector.load %arg4[%c0_17, %c0_18, %c0_19] : memref<3x4x32xf32, #tpu.memory_space<vmem>>, vector<1x4x32xf32>
      %26 = vector.shape_cast %25 : vector<1x4x32xf32> to vector<4x32xf32>
      %cst_20 = arith.constant dense<0.000000e+00> : vector<2x32xf32>
      %27 = tpu.matmul %24, %26, %cst_20 {dimension_numbers = #tpu.dot_dimension_numbers<[1], [0], [0], [1], [0, 0, 1, 1], [], []>} : vector<2x4xf32>, vector<4x32xf32>, vector<2x32xf32> -> vector<2x32xf32>
      %c0_21 = arith.constant 0 : index
      %c0_22 = arith.constant 0 : index
      %c0_23 = arith.constant 0 : index
      %28 = vector.load %arg5[%c0_21, %c0_22, %c0_23] : memref<3x1x32xf32, #tpu.memory_space<vmem>>, vector<1x1x32xf32>
      %29 = vector.shape_cast %28 : vector<1x1x32xf32> to vector<1x32xf32>
      %30 = vector.broadcast %29 : vector<1x32xf32> to vector<2x32xf32>
      %31 = arith.addf %27, %30 : vector<2x32xf32>
      %c0_24 = arith.constant 0 : index
      %c0_25 = arith.constant 0 : index
      %c0_26 = arith.constant 0 : index
      %32 = vector.load %arg6[%c0_24, %c0_25, %c0_26] : memref<3x32x32xf32, #tpu.memory_space<vmem>>, vector<1x32x32xf32>
      %33 = vector.shape_cast %32 : vector<1x32x32xf32> to vector<32x32xf32>
      %cst_27 = arith.constant dense<0.000000e+00> : vector<2x32xf32>
      %34 = tpu.matmul %31, %33, %cst_27 {dimension_numbers = #tpu.dot_dimension_numbers<[1], [0], [0], [1], [0, 0, 1, 1], [], []>} : vector<2x32xf32>, vector<32x32xf32>, vector<2x32xf32> -> vector<2x32xf32>
      %c0_28 = arith.constant 0 : index
      %c0_29 = arith.constant 0 : index
      %c0_30 = arith.constant 0 : index
      %35 = vector.load %arg7[%c0_28, %c0_29, %c0_30] : memref<3x1x32xf32, #tpu.memory_space<vmem>>, vector<1x1x32xf32>
      %36 = vector.shape_cast %35 : vector<1x1x32xf32> to vector<1x32xf32>
      %37 = vector.broadcast %36 : vector<1x32xf32> to vector<2x32xf32>
      %38 = arith.addf %34, %37 : vector<2x32xf32>
      %cst_31 = arith.constant 0.000000e+00 : f32
      %39 = vector.broadcast %cst_31 : f32 to vector<2x32xf32>
      %40 = arith.maximumf %38, %39 : vector<2x32xf32>
      %c0_32 = arith.constant 0 : index
      %c0_33 = arith.constant 0 : index
      %c0_34 = arith.constant 0 : index
      %41 = vector.load %arg8[%c0_32, %c0_33, %c0_34] : memref<3x32x16xf32, #tpu.memory_space<vmem>>, vector<1x32x16xf32>
      %42 = vector.shape_cast %41 : vector<1x32x16xf32> to vector<32x16xf32>
      %cst_35 = arith.constant dense<0.000000e+00> : vector<2x16xf32>
      %43 = tpu.matmul %40, %42, %cst_35 {dimension_numbers = #tpu.dot_dimension_numbers<[1], [0], [0], [1], [0, 0, 1, 1], [], []>} : vector<2x32xf32>, vector<32x16xf32>, vector<2x16xf32> -> vector<2x16xf32>
      %c0_36 = arith.constant 0 : index
      %c0_37 = arith.constant 0 : index
      %c0_38 = arith.constant 0 : index
      %44 = vector.load %arg9[%c0_36, %c0_37, %c0_38] : memref<3x1x16xf32, #tpu.memory_space<vmem>>, vector<1x1x16xf32>
      %45 = vector.shape_cast %44 : vector<1x1x16xf32> to vector<1x16xf32>
      %46 = vector.broadcast %45 : vector<1x16xf32> to vector<2x16xf32>
      %47 = arith.addf %43, %46 : vector<2x16xf32>
      %48 = arith.mulf %47, %47 : vector<2x16xf32>
      %cst_39 = arith.constant dense<0.000000e+00> : vector<2xf32>
      %49 = vector.multi_reduction <add>, %48, %cst_39 [1] : vector<2x16xf32> to vector<2xf32>
      %50 = vector.shape_cast %49 : vector<2xf32> to vector<2x1xf32>
      %51 = math.sqrt %50 : vector<2x1xf32>
      %cst_40 = arith.constant 9.99999996E-13 : f32
      %52 = vector.broadcast %cst_40 : f32 to vector<2x1xf32>
      %53 = arith.maximumf %51, %52 : vector<2x1xf32>
      %54 = vector.broadcast %53 : vector<2x1xf32> to vector<2x16xf32>
      %55 = arith.divf %47, %54 : vector<2x16xf32>
      %56 = vector.extract_strided_slice %23 {offsets = [2, 0], sizes = [2, 4], strides = [1, 1]} : vector<6x4xf32> to vector<2x4xf32>
      %c1 = arith.constant 1 : index
      %c0_41 = arith.constant 0 : index
      %c0_42 = arith.constant 0 : index
      %57 = vector.load %arg4[%c1, %c0_41, %c0_42] : memref<3x4x32xf32, #tpu.memory_space<vmem>>, vector<1x4x32xf32>
      %58 = vector.shape_cast %57 : vector<1x4x32xf32> to vector<4x32xf32>
      %cst_43 = arith.constant dense<0.000000e+00> : vector<2x32xf32>
      %59 = tpu.matmul %56, %58, %cst_43 {dimension_numbers = #tpu.dot_dimension_numbers<[1], [0], [0], [1], [0, 0, 1, 1], [], []>} : vector<2x4xf32>, vector<4x32xf32>, vector<2x32xf32> -> vector<2x32xf32>
      %c1_44 = arith.constant 1 : index
      %c0_45 = arith.constant 0 : index
      %c0_46 = arith.constant 0 : index
      %60 = vector.load %arg5[%c1_44, %c0_45, %c0_46] : memref<3x1x32xf32, #tpu.memory_space<vmem>>, vector<1x1x32xf32>
      %61 = vector.shape_cast %60 : vector<1x1x32xf32> to vector<1x32xf32>
      %62 = vector.broadcast %61 : vector<1x32xf32> to vector<2x32xf32>
      %63 = arith.addf %59, %62 : vector<2x32xf32>
      %c1_47 = arith.constant 1 : index
      %c0_48 = arith.constant 0 : index
      %c0_49 = arith.constant 0 : index
      %64 = vector.load %arg6[%c1_47, %c0_48, %c0_49] : memref<3x32x32xf32, #tpu.memory_space<vmem>>, vector<1x32x32xf32>
      %65 = vector.shape_cast %64 : vector<1x32x32xf32> to vector<32x32xf32>
      %cst_50 = arith.constant dense<0.000000e+00> : vector<2x32xf32>
      %66 = tpu.matmul %63, %65, %cst_50 {dimension_numbers = #tpu.dot_dimension_numbers<[1], [0], [0], [1], [0, 0, 1, 1], [], []>} : vector<2x32xf32>, vector<32x32xf32>, vector<2x32xf32> -> vector<2x32xf32>
      %c1_51 = arith.constant 1 : index
      %c0_52 = arith.constant 0 : index
      %c0_53 = arith.constant 0 : index
      %67 = vector.load %arg7[%c1_51, %c0_52, %c0_53] : memref<3x1x32xf32, #tpu.memory_space<vmem>>, vector<1x1x32xf32>
      %68 = vector.shape_cast %67 : vector<1x1x32xf32> to vector<1x32xf32>
      %69 = vector.broadcast %68 : vector<1x32xf32> to vector<2x32xf32>
      %70 = arith.addf %66, %69 : vector<2x32xf32>
      %cst_54 = arith.constant 0.000000e+00 : f32
      %71 = vector.broadcast %cst_54 : f32 to vector<2x32xf32>
      %72 = arith.maximumf %70, %71 : vector<2x32xf32>
      %c1_55 = arith.constant 1 : index
      %c0_56 = arith.constant 0 : index
      %c0_57 = arith.constant 0 : index
      %73 = vector.load %arg8[%c1_55, %c0_56, %c0_57] : memref<3x32x16xf32, #tpu.memory_space<vmem>>, vector<1x32x16xf32>
      %74 = vector.shape_cast %73 : vector<1x32x16xf32> to vector<32x16xf32>
      %cst_58 = arith.constant dense<0.000000e+00> : vector<2x16xf32>
      %75 = tpu.matmul %72, %74, %cst_58 {dimension_numbers = #tpu.dot_dimension_numbers<[1], [0], [0], [1], [0, 0, 1, 1], [], []>} : vector<2x32xf32>, vector<32x16xf32>, vector<2x16xf32> -> vector<2x16xf32>
      %c1_59 = arith.constant 1 : index
      %c0_60 = arith.constant 0 : index
      %c0_61 = arith.constant 0 : index
      %76 = vector.load %arg9[%c1_59, %c0_60, %c0_61] : memref<3x1x16xf32, #tpu.memory_space<vmem>>, vector<1x1x16xf32>
      %77 = vector.shape_cast %76 : vector<1x1x16xf32> to vector<1x16xf32>
      %78 = vector.broadcast %77 : vector<1x16xf32> to vector<2x16xf32>
      %79 = arith.addf %75, %78 : vector<2x16xf32>
      %80 = arith.mulf %79, %79 : vector<2x16xf32>
      %cst_62 = arith.constant dense<0.000000e+00> : vector<2xf32>
      %81 = vector.multi_reduction <add>, %80, %cst_62 [1] : vector<2x16xf32> to vector<2xf32>
      %82 = vector.shape_cast %81 : vector<2xf32> to vector<2x1xf32>
      %83 = math.sqrt %82 : vector<2x1xf32>
      %cst_63 = arith.constant 9.99999996E-13 : f32
      %84 = vector.broadcast %cst_63 : f32 to vector<2x1xf32>
      %85 = arith.maximumf %83, %84 : vector<2x1xf32>
      %86 = vector.broadcast %85 : vector<2x1xf32> to vector<2x16xf32>
      %87 = arith.divf %79, %86 : vector<2x16xf32>
      %88 = vector.extract_strided_slice %23 {offsets = [4, 0], sizes = [2, 4], strides = [1, 1]} : vector<6x4xf32> to vector<2x4xf32>
      %c2 = arith.constant 2 : index
      %c0_64 = arith.constant 0 : index
      %c0_65 = arith.constant 0 : index
      %89 = vector.load %arg4[%c2, %c0_64, %c0_65] : memref<3x4x32xf32, #tpu.memory_space<vmem>>, vector<1x4x32xf32>
      %90 = vector.shape_cast %89 : vector<1x4x32xf32> to vector<4x32xf32>
      %cst_66 = arith.constant dense<0.000000e+00> : vector<2x32xf32>
      %91 = tpu.matmul %88, %90, %cst_66 {dimension_numbers = #tpu.dot_dimension_numbers<[1], [0], [0], [1], [0, 0, 1, 1], [], []>} : vector<2x4xf32>, vector<4x32xf32>, vector<2x32xf32> -> vector<2x32xf32>
      %c2_67 = arith.constant 2 : index
      %c0_68 = arith.constant 0 : index
      %c0_69 = arith.constant 0 : index
      %92 = vector.load %arg5[%c2_67, %c0_68, %c0_69] : memref<3x1x32xf32, #tpu.memory_space<vmem>>, vector<1x1x32xf32>
      %93 = vector.shape_cast %92 : vector<1x1x32xf32> to vector<1x32xf32>
      %94 = vector.broadcast %93 : vector<1x32xf32> to vector<2x32xf32>
      %95 = arith.addf %91, %94 : vector<2x32xf32>
      %c2_70 = arith.constant 2 : index
      %c0_71 = arith.constant 0 : index
      %c0_72 = arith.constant 0 : index
      %96 = vector.load %arg6[%c2_70, %c0_71, %c0_72] : memref<3x32x32xf32, #tpu.memory_space<vmem>>, vector<1x32x32xf32>
      %97 = vector.shape_cast %96 : vector<1x32x32xf32> to vector<32x32xf32>
      %cst_73 = arith.constant dense<0.000000e+00> : vector<2x32xf32>
      %98 = tpu.matmul %95, %97, %cst_73 {dimension_numbers = #tpu.dot_dimension_numbers<[1], [0], [0], [1], [0, 0, 1, 1], [], []>} : vector<2x32xf32>, vector<32x32xf32>, vector<2x32xf32> -> vector<2x32xf32>
      %c2_74 = arith.constant 2 : index
      %c0_75 = arith.constant 0 : index
      %c0_76 = arith.constant 0 : index
      %99 = vector.load %arg7[%c2_74, %c0_75, %c0_76] : memref<3x1x32xf32, #tpu.memory_space<vmem>>, vector<1x1x32xf32>
      %100 = vector.shape_cast %99 : vector<1x1x32xf32> to vector<1x32xf32>
      %101 = vector.broadcast %100 : vector<1x32xf32> to vector<2x32xf32>
      %102 = arith.addf %98, %101 : vector<2x32xf32>
      %cst_77 = arith.constant 0.000000e+00 : f32
      %103 = vector.broadcast %cst_77 : f32 to vector<2x32xf32>
      %104 = arith.maximumf %102, %103 : vector<2x32xf32>
      %c2_78 = arith.constant 2 : index
      %c0_79 = arith.constant 0 : index
      %c0_80 = arith.constant 0 : index
      %105 = vector.load %arg8[%c2_78, %c0_79, %c0_80] : memref<3x32x16xf32, #tpu.memory_space<vmem>>, vector<1x32x16xf32>
      %106 = vector.shape_cast %105 : vector<1x32x16xf32> to vector<32x16xf32>
      %cst_81 = arith.constant dense<0.000000e+00> : vector<2x16xf32>
      %107 = tpu.matmul %104, %106, %cst_81 {dimension_numbers = #tpu.dot_dimension_numbers<[1], [0], [0], [1], [0, 0, 1, 1], [], []>} : vector<2x32xf32>, vector<32x16xf32>, vector<2x16xf32> -> vector<2x16xf32>
      %c2_82 = arith.constant 2 : index
      %c0_83 = arith.constant 0 : index
      %c0_84 = arith.constant 0 : index
      %108 = vector.load %arg9[%c2_82, %c0_83, %c0_84] : memref<3x1x16xf32, #tpu.memory_space<vmem>>, vector<1x1x16xf32>
      %109 = vector.shape_cast %108 : vector<1x1x16xf32> to vector<1x16xf32>
      %110 = vector.broadcast %109 : vector<1x16xf32> to vector<2x16xf32>
      %111 = arith.addf %107, %110 : vector<2x16xf32>
      %112 = arith.mulf %111, %111 : vector<2x16xf32>
      %cst_85 = arith.constant dense<0.000000e+00> : vector<2xf32>
      %113 = vector.multi_reduction <add>, %112, %cst_85 [1] : vector<2x16xf32> to vector<2xf32>
      %114 = vector.shape_cast %113 : vector<2xf32> to vector<2x1xf32>
      %115 = math.sqrt %114 : vector<2x1xf32>
      %cst_86 = arith.constant 9.99999996E-13 : f32
      %116 = vector.broadcast %cst_86 : f32 to vector<2x1xf32>
      %117 = arith.maximumf %115, %116 : vector<2x1xf32>
      %118 = vector.broadcast %117 : vector<2x1xf32> to vector<2x16xf32>
      %119 = arith.divf %111, %118 : vector<2x16xf32>
      %120 = tpu.iota {dimensions = array<i32: 1>} : vector<2x128xi32>
      %121 = arith.mulf %55, %87 : vector<2x16xf32>
      %cst_87 = arith.constant dense<0.000000e+00> : vector<2xf32>
      %122 = vector.multi_reduction <add>, %121, %cst_87 [1] : vector<2x16xf32> to vector<2xf32>
      %123 = vector.shape_cast %122 : vector<2xf32> to vector<2x1xf32>
      %c0_88 = arith.constant 0 : index
      %c0_89 = arith.constant 0 : index
      %124 = vector.load %arg10[%c0_88, %c0_89] : memref<16x128xf32, #tpu.memory_space<vmem>>, vector<16x128xf32>
      %cst_90 = arith.constant dense<0.000000e+00> : vector<2x128xf32>
      %125 = tpu.matmul %55, %124, %cst_90 {dimension_numbers = #tpu.dot_dimension_numbers<[1], [0], [0], [1], [0, 0, 1, 1], [], []>} : vector<2x16xf32>, vector<16x128xf32>, vector<2x128xf32> -> vector<2x128xf32>
      %c0_i32_91 = arith.constant 0 : i32
      %126 = vector.broadcast %c0_i32_91 : i32 to vector<2x128xi32>
      %127 = arith.cmpi eq, %120, %126 : vector<2x128xi32>
      %cst_92 = arith.constant 0.000000e+00 : f32
      %128 = vector.shape_cast %123 : vector<2x1xf32> to vector<2x1xf32>
      %129 = vector.broadcast %128 : vector<2x1xf32> to vector<2x128xf32>
      %130 = vector.broadcast %cst_92 : f32 to vector<2x128xf32>
      %131 = arith.select %127, %129, %130 : vector<2x128xi1>, vector<2x128xf32>
      %132 = arith.addf %125, %131 : vector<2x128xf32>
      %cst_93 = arith.constant 14.2857141 : f32
      %133 = vector.broadcast %cst_93 : f32 to vector<2x128xf32>
      %134 = arith.mulf %132, %133 : vector<2x128xf32>
      %c0_94 = arith.constant 0 : index
      %c0_95 = arith.constant 0 : index
      %135 = vector.load %arg15[%c0_94, %c0_95] : memref<2x128xf32, #tpu.memory_space<vmem>>, vector<2x128xf32>
      tpu.vector_store %arg15[%c0_94, %c0_95], %134 {strides = array<i32>} : memref<2x128xf32, #tpu.memory_space<vmem>>, vector<2x128xf32>,
      %c1_i32 = arith.constant 1 : i32
      %136 = vector.broadcast %c1_i32 : i32 to vector<2x128xi32>
      %137 = arith.cmpi sge, %120, %136 : vector<2x128xi32>
      %c64_i32 = arith.constant 64 : i32
      %138 = vector.broadcast %c64_i32 : i32 to vector<2x128xi32>
      %139 = arith.cmpi sle, %120, %138 : vector<2x128xi32>
      %140 = arith.andi %137, %139 : vector<2x128xi1>
      %141 = tpu.iota {dimensions = array<i32: 0>} : vector<2x128xi32>
      %c0_i32_96 = arith.constant 0 : i32
      %142 = vector.broadcast %c0_i32_96 : i32 to vector<2x128xi32>
      %c0_i32_97 = arith.constant 0 : i32
      %143 = vector.broadcast %c0_i32_97 : i32 to vector<2x128xi32>
      %144 = arith.cmpi eq, %141, %143 : vector<2x128xi32>
      %c0_98 = arith.constant 0 : index
      %145 = memref.load %arg2[%c0_98] : memref<2xi32, #tpu.memory_space<smem>>
      %146 = vector.broadcast %145 : i32 to vector<2x128xi32>
      %147 = arith.select %144, %146, %142 : vector<2x128xi1>, vector<2x128xi32>
      %c1_i32_99 = arith.constant 1 : i32
      %148 = vector.broadcast %c1_i32_99 : i32 to vector<2x128xi32>
      %149 = arith.cmpi eq, %141, %148 : vector<2x128xi32>
      %c1_100 = arith.constant 1 : index
      %150 = memref.load %arg2[%c1_100] : memref<2xi32, #tpu.memory_space<smem>>
      %151 = vector.broadcast %150 : i32 to vector<2x128xi32>
      %152 = arith.select %149, %151, %147 : vector<2x128xi1>, vector<2x128xi32>
      %c0_101 = arith.constant 0 : index
      %c0_102 = arith.constant 0 : index
      %153 = vector.load %arg12[%c0_101, %c0_102] : memref<1x128xi32, #tpu.memory_space<vmem>>, vector<1x128xi32>
      %154 = vector.broadcast %153 : vector<1x128xi32> to vector<2x128xi32>
      %155 = arith.cmpi eq, %154, %152 : vector<2x128xi32>
      %156 = arith.andi %155, %140 : vector<2x128xi1>
      %cst_103 = arith.constant dense<true> : vector<2x128xi1>
      %157 = arith.xori %156, %cst_103 : vector<2x128xi1>
      %158 = arith.andi %140, %157 : vector<2x128xi1>
      %c0_104 = arith.constant 0 : index
      %c0_105 = arith.constant 0 : index
      %159 = vector.load %arg11[%c0_104, %c0_105] : memref<16x128xf32, #tpu.memory_space<vmem>>, vector<16x128xf32>
      %cst_106 = arith.constant dense<0.000000e+00> : vector<2x128xf32>
      %160 = tpu.matmul %119, %159, %cst_106 {dimension_numbers = #tpu.dot_dimension_numbers<[1], [0], [0], [1], [0, 0, 1, 1], [], []>} : vector<2x16xf32>, vector<16x128xf32>, vector<2x128xf32> -> vector<2x128xf32>
      %cst_107 = arith.constant 0xFF800000 : f32
      %161 = vector.broadcast %cst_107 : f32 to vector<2x128xf32>
      %162 = arith.select %158, %160, %161 : vector<2x128xi1>, vector<2x128xf32>
      %c0_108 = arith.constant 0 : index
      %163 = memref.load %arg1[%c0_108] : memref<1xi32, #tpu.memory_space<smem>>
      %cst_109 = arith.constant dense<0xFF800000> : vector<2xf32>
      %164 = vector.multi_reduction <maximumf>, %162, %cst_109 [1] : vector<2x128xf32> to vector<2xf32>
      %165 = vector.shape_cast %164 : vector<2xf32> to vector<2x1xf32>
      %166 = vector.broadcast %165 : vector<2x1xf32> to vector<2x128xf32>
      %167 = arith.cmpf oeq, %162, %166 : vector<2x128xf32>
      %c128_i32 = arith.constant 128 : i32
      %168 = vector.broadcast %c128_i32 : i32 to vector<2x128xi32>
      %169 = arith.select %167, %120, %168 : vector<2x128xi1>, vector<2x128xi32>
      %cst_110 = arith.constant dense<2147483647> : vector<2xi32>
      %170 = vector.multi_reduction <minsi>, %169, %cst_110 [1] : vector<2x128xi32> to vector<2xi32>
      %171 = vector.shape_cast %170 : vector<2xi32> to vector<2x1xi32>
      %172 = vector.broadcast %171 : vector<2x1xi32> to vector<2x128xi32>
      %173 = arith.cmpi eq, %120, %172 : vector<2x128xi32>
      %c0_i32_111 = arith.constant 0 : i32
      %174 = arith.cmpi sgt, %163, %c0_i32_111 : i32
      %175 = vector.broadcast %174 : i1 to vector<2x128xi1>
      %176 = arith.andi %173, %175 : vector<2x128xi1>
      %cst_112 = arith.constant 0xFF800000 : f32
      %177 = vector.broadcast %cst_112 : f32 to vector<2x128xf32>
      %178 = arith.select %176, %177, %162 : vector<2x128xi1>, vector<2x128xf32>
      %cst_113 = arith.constant dense<0xFF800000> : vector<2xf32>
      %179 = vector.multi_reduction <maximumf>, %178, %cst_113 [1] : vector<2x128xf32> to vector<2xf32>
      %180 = vector.shape_cast %179 : vector<2xf32> to vector<2x1xf32>
      %181 = vector.broadcast %180 : vector<2x1xf32> to vector<2x128xf32>
      %182 = arith.cmpf oeq, %178, %181 : vector<2x128xf32>
      %c128_i32_114 = arith.constant 128 : i32
      %183 = vector.broadcast %c128_i32_114 : i32 to vector<2x128xi32>
      %184 = arith.select %182, %120, %183 : vector<2x128xi1>, vector<2x128xi32>
      %cst_115 = arith.constant dense<2147483647> : vector<2xi32>
      %185 = vector.multi_reduction <minsi>, %184, %cst_115 [1] : vector<2x128xi32> to vector<2xi32>
      %186 = vector.shape_cast %185 : vector<2xi32> to vector<2x1xi32>
      %187 = vector.broadcast %186 : vector<2x1xi32> to vector<2x128xi32>
      %188 = arith.cmpi eq, %120, %187 : vector<2x128xi32>
      %c1_i32_116 = arith.constant 1 : i32
      %189 = arith.cmpi sgt, %163, %c1_i32_116 : i32
      %190 = vector.broadcast %189 : i1 to vector<2x128xi1>
      %191 = arith.andi %188, %190 : vector<2x128xi1>
      %cst_117 = arith.constant 0xFF800000 : f32
      %192 = vector.broadcast %cst_117 : f32 to vector<2x128xf32>
      %193 = arith.select %191, %192, %178 : vector<2x128xi1>, vector<2x128xf32>
      %cst_118 = arith.constant dense<0xFF800000> : vector<2xf32>
      %194 = vector.multi_reduction <maximumf>, %193, %cst_118 [1] : vector<2x128xf32> to vector<2xf32>
      %195 = vector.shape_cast %194 : vector<2xf32> to vector<2x1xf32>
      %196 = vector.broadcast %195 : vector<2x1xf32> to vector<2x128xf32>
      %197 = arith.cmpf oeq, %193, %196 : vector<2x128xf32>
      %c128_i32_119 = arith.constant 128 : i32
      %198 = vector.broadcast %c128_i32_119 : i32 to vector<2x128xi32>
      %199 = arith.select %197, %120, %198 : vector<2x128xi1>, vector<2x128xi32>
      %cst_120 = arith.constant dense<2147483647> : vector<2xi32>
      %200 = vector.multi_reduction <minsi>, %199, %cst_120 [1] : vector<2x128xi32> to vector<2xi32>
      %201 = vector.shape_cast %200 : vector<2xi32> to vector<2x1xi32>
      %202 = vector.broadcast %201 : vector<2x1xi32> to vector<2x128xi32>
      %203 = arith.cmpi eq, %120, %202 : vector<2x128xi32>
      %c2_i32 = arith.constant 2 : i32
      %204 = arith.cmpi sgt, %163, %c2_i32 : i32
      %205 = vector.broadcast %204 : i1 to vector<2x128xi1>
      %206 = arith.andi %203, %205 : vector<2x128xi1>
      %cst_121 = arith.constant 0xFF800000 : f32
      %207 = vector.broadcast %cst_121 : f32 to vector<2x128xf32>
      %208 = arith.select %206, %207, %193 : vector<2x128xi1>, vector<2x128xf32>
      %cst_122 = arith.constant 0xFF800000 : f32
      %209 = vector.broadcast %cst_122 : f32 to vector<2x128xf32>
      %210 = arith.cmpf oeq, %208, %209 : vector<2x128xf32>
      %211 = arith.andi %210, %158 : vector<2x128xi1>
      %212 = arith.ori %156, %211 : vector<2x128xi1>
      %c0_i32_123 = arith.constant 0 : i32
      %213 = vector.broadcast %c0_i32_123 : i32 to vector<2x128xi32>
      %214 = arith.cmpi eq, %120, %213 : vector<2x128xi32>
      %215 = arith.extui %212 : vector<2x128xi1> to vector<2x128xi32>
      %c1_i32_124 = arith.constant 1 : i32
      %216 = vector.broadcast %c1_i32_124 : i32 to vector<2x128xi32>
      %217 = arith.select %214, %216, %215 : vector<2x128xi1>, vector<2x128xi32>
      %c0_125 = arith.constant 0 : index
      %c0_126 = arith.constant 0 : index
      %218 = vector.load %arg16[%c0_125, %c0_126] : memref<2x128xi32, #tpu.memory_space<vmem>>, vector<2x128xi32>
      tpu.vector_store %arg16[%c0_125, %c0_126], %217 {strides = array<i32>} : memref<2x128xi32, #tpu.memory_space<vmem>>, vector<2x128xi32>,
    } else {
    }
    return
  }
  func.func @transform_0(%arg0: i32, %arg1: memref<1xi32, #tpu.memory_space<smem>>, %arg2: memref<2xi32, #tpu.memory_space<smem>>) -> (i32, i32) {
    %c0_i32 = arith.constant 0 : i32
    %c0_i32_0 = arith.constant 0 : i32
    return %c0_i32, %arg0 : i32, i32
  }
  func.func @transform_1(%arg0: i32, %arg1: memref<1xi32, #tpu.memory_space<smem>>, %arg2: memref<2xi32, #tpu.memory_space<smem>>) -> (i32, i32, i32) {
    %c0_i32 = arith.constant 0 : i32
    %c0_i32_0 = arith.constant 0 : i32
    %c0_i32_1 = arith.constant 0 : i32
    %c0_i32_2 = arith.constant 0 : i32
    return %c0_i32, %c0_i32_0, %c0_i32_1 : i32, i32, i32
  }
  func.func @transform_2(%arg0: i32, %arg1: memref<1xi32, #tpu.memory_space<smem>>, %arg2: memref<2xi32, #tpu.memory_space<smem>>) -> (i32, i32, i32) {
    %c0_i32 = arith.constant 0 : i32
    %c0_i32_0 = arith.constant 0 : i32
    %c0_i32_1 = arith.constant 0 : i32
    %c0_i32_2 = arith.constant 0 : i32
    return %c0_i32, %c0_i32_0, %c0_i32_1 : i32, i32, i32
  }
  func.func @transform_3(%arg0: i32, %arg1: memref<1xi32, #tpu.memory_space<smem>>, %arg2: memref<2xi32, #tpu.memory_space<smem>>) -> (i32, i32, i32) {
    %c0_i32 = arith.constant 0 : i32
    %c0_i32_0 = arith.constant 0 : i32
    %c0_i32_1 = arith.constant 0 : i32
    %c0_i32_2 = arith.constant 0 : i32
    return %c0_i32, %c0_i32_0, %c0_i32_1 : i32, i32, i32
  }
  func.func @transform_4(%arg0: i32, %arg1: memref<1xi32, #tpu.memory_space<smem>>, %arg2: memref<2xi32, #tpu.memory_space<smem>>) -> (i32, i32, i32) {
    %c0_i32 = arith.constant 0 : i32
    %c0_i32_0 = arith.constant 0 : i32
    %c0_i32_1 = arith.constant 0 : i32
    %c0_i32_2 = arith.constant 0 : i32
    return %c0_i32, %c0_i32_0, %c0_i32_1 : i32, i32, i32
  }
  func.func @transform_5(%arg0: i32, %arg1: memref<1xi32, #tpu.memory_space<smem>>, %arg2: memref<2xi32, #tpu.memory_space<smem>>) -> (i32, i32, i32) {
    %c0_i32 = arith.constant 0 : i32
    %c0_i32_0 = arith.constant 0 : i32
    %c0_i32_1 = arith.constant 0 : i32
    %c0_i32_2 = arith.constant 0 : i32
    return %c0_i32, %c0_i32_0, %c0_i32_1 : i32, i32, i32
  }
  func.func @transform_6(%arg0: i32, %arg1: memref<1xi32, #tpu.memory_space<smem>>, %arg2: memref<2xi32, #tpu.memory_space<smem>>) -> (i32, i32, i32) {
    %c0_i32 = arith.constant 0 : i32
    %c0_i32_0 = arith.constant 0 : i32
    %c0_i32_1 = arith.constant 0 : i32
    %c0_i32_2 = arith.constant 0 : i32
    return %c0_i32, %c0_i32_0, %c0_i32_1 : i32, i32, i32
  }
  func.func @transform_7(%arg0: i32, %arg1: memref<1xi32, #tpu.memory_space<smem>>, %arg2: memref<2xi32, #tpu.memory_space<smem>>) -> (i32, i32) {
    %c0_i32 = arith.constant 0 : i32
    %c0_i32_0 = arith.constant 0 : i32
    %c0_i32_1 = arith.constant 0 : i32
    return %c0_i32, %c0_i32_0 : i32, i32
  }
  func.func @transform_8(%arg0: i32, %arg1: memref<1xi32, #tpu.memory_space<smem>>, %arg2: memref<2xi32, #tpu.memory_space<smem>>) -> (i32, i32) {
    %c0_i32 = arith.constant 0 : i32
    %c0_i32_0 = arith.constant 0 : i32
    %c0_i32_1 = arith.constant 0 : i32
    return %c0_i32, %c0_i32_0 : i32, i32
  }
  func.func @transform_9(%arg0: i32, %arg1: memref<1xi32, #tpu.memory_space<smem>>, %arg2: memref<2xi32, #tpu.memory_space<smem>>) -> (i32, i32) {
    %c0_i32 = arith.constant 0 : i32
    %c0_i32_0 = arith.constant 0 : i32
    %c0_i32_1 = arith.constant 0 : i32
    return %c0_i32, %c0_i32_0 : i32, i32
  }
  func.func @transform_10(%arg0: i32, %arg1: memref<1xi32, #tpu.memory_space<smem>>, %arg2: memref<2xi32, #tpu.memory_space<smem>>) -> (i32, i32) {
    %c0_i32 = arith.constant 0 : i32
    %c0_i32_0 = arith.constant 0 : i32
    %c0_i32_1 = arith.constant 0 : i32
    return %c0_i32, %c0_i32_0 : i32, i32
  }
  func.func @transform_11(%arg0: i32, %arg1: memref<1xi32, #tpu.memory_space<smem>>, %arg2: memref<2xi32, #tpu.memory_space<smem>>) -> (i32, i32) {
    %c0_i32 = arith.constant 0 : i32
    %c0_i32_0 = arith.constant 0 : i32
    %c0_i32_1 = arith.constant 0 : i32
    return %c0_i32, %c0_i32_0 : i32, i32
  }
  func.func @transform_12(%arg0: i32, %arg1: memref<1xi32, #tpu.memory_space<smem>>, %arg2: memref<2xi32, #tpu.memory_space<smem>>) -> (i32, i32) {
    %c0_i32 = arith.constant 0 : i32
    %c0_i32_0 = arith.constant 0 : i32
    %c0_i32_1 = arith.constant 0 : i32
    return %c0_i32, %c0_i32_0 : i32, i32
  }
  func.func @transform_13(%arg0: i32, %arg1: memref<1xi32, #tpu.memory_space<smem>>, %arg2: memref<2xi32, #tpu.memory_space<smem>>) -> (i32, i32) {
    %c0_i32 = arith.constant 0 : i32
    %c0_i32_0 = arith.constant 0 : i32
    %c0_i32_1 = arith.constant 0 : i32
    return %c0_i32, %c0_i32_0 : i32, i32
  }
}

</mosaic_0001>

<llo_original>
// kernel: tpu_custom_call.1
$region0: #{tpu_custom_call.1}
  #allocation0 [shape = 'u32[]', space=smem, size = 0x4, offset = 0x4, fixed_abs, tag = 'smem constant byte address 0x4 - core index']
  #allocation1 [shape = 'u32[144,128]{1,0:T(1,128)}', space=vmem, size = 0x12000, scoped, tag = 'internal scratch']
  #allocation2 [shape = 'f32[24,128]{1,0:T(8,128)}', space=vmem, size = 0x3000, scoped, tag = 'scratch operand']
  #allocation3 [shape = 's32[1]{0}', space=sflag, size = 0x4, scoped, tag = 'scoped memory for tpu_custom_call.1']
  #allocation4 [shape = 's32[1]{0:T(128)S(6)}', space=smem, size = 0x200, scoped, tag = 'prefetched SMEM operand 0']
  #allocation5 [shape = 'u8[512]{0}', space=smem, size = 0x200, scoped, tag = 'prefetched SMEM operand 1']
  %s0 = inlined_call_operand.<no memory space> [shape: s32[1], index: 0, kind: input, shape index: {}]
  %s1 = inlined_call_operand.vmem [shape: s32[2], index: 1, kind: input, shape index: {}]
  %s2 = inlined_call_operand.vmem [shape: bf16[24,256], index: 2, kind: input, shape index: {}]
  %s3 = inlined_call_operand.vmem [shape: f32[3,4,32], index: 3, kind: input, shape index: {}]
  %s4 = inlined_call_operand.vmem [shape: f32[3,1,32], index: 4, kind: input, shape index: {}]
  %s5 = inlined_call_operand.vmem [shape: f32[3,32,32], index: 5, kind: input, shape index: {}]
  %s6 = inlined_call_operand.vmem [shape: f32[3,1,32], index: 6, kind: input, shape index: {}]
  %s7 = inlined_call_operand.vmem [shape: f32[3,32,16], index: 7, kind: input, shape index: {}]
  %s8 = inlined_call_operand.hbm [shape: f32[3,1,16], index: 8, kind: input, shape index: {}]
  %s9 = inlined_call_operand.vmem [shape: f32[16,128], index: 9, kind: input, shape index: {}]
  %s10 = inlined_call_operand.vmem [shape: f32[16,128], index: 10, kind: input, shape index: {}]
  %s11 = inlined_call_operand.vmem [shape: s32[1,128], index: 11, kind: input, shape index: {}]
  %s12 = inlined_call_operand.vmem [shape: f32[6,24], index: 12, kind: input, shape index: {}]
  %s13 = inlined_call_operand.vmem [shape: f32[24,4], index: 13, kind: input, shape index: {}]
  %s14 = inlined_call_operand.hbm [shape: f32[2,128], index: 14, kind: output, shape index: {0}]
  %s15 = inlined_call_operand.hbm [shape: s32[2,128], index: 15, kind: output, shape index: {1}]
  %16 = xla_tuple %s14, %s15
  %s17 = sld [smem:[#allocation0]]
  $region78: #{tpu_custom_call.1} parent=0
    _
  %s19 = ssub.s32 1, %s17
  %s20 = scalar_select 0, %s19, %s17
  %21 = sst [smem:[#allocation4]] %s0
  %s22 = sshll.u32 %s1, 4
  %s23 = int_to_ptr.vmem [resolvable:$true] %s22
  %25 = dma.vmem_to_smem %s23, 16, [#allocation5], [#allocation3]
  %26 = dma.done [#allocation3], 16
  %27 = sfence
  $region1: #{tpu_custom_call.1} parent=0
    #allocation6 [shape = 'u8[1536]{0}', space=vmem, size = 0x800, scoped, tag = 'input window, operand 8, single buffered']
    #allocation7 [shape = 's32[1]{0}', space=sflag, size = 0x4, scoped, tag = 'scoped memory for tpu_custom_call.1']
    #allocation8 [shape = 's32[1]{0}', space=sflag, size = 0x4, scoped, tag = 'scoped memory for tpu_custom_call.1']
    #allocation9 [shape = 'u8[1024]{0}', space=vmem, size = 0x400, scoped, tag = 'output window, operand 0, single buffered']
    #allocation10 [shape = 'u8[1024]{0}', space=vmem, size = 0x400, scoped, tag = 'output window, operand 1, single buffered']
    #allocation11 [shape = 's32[1]{0}', space=sflag, size = 0x4, scoped, tag = 'scoped memory for tpu_custom_call.1']
    %28 = vsyncpa [#allocation7], 0
    %29 = vsyncpa [#allocation8], 0
    %30 = vsyncpa [#allocation11], 0
    // Predicated region
    $region2: #{tpu_custom_call.1} parent=1 // pred_check
      _
    $region3: #{tpu_custom_call.1} parent=1 // pred_check_branch
      %32 = sbr.rel (0) target = $region5
    $region4: #{tpu_custom_call.1} parent=1 // pred_region
      _
    $region5: #{tpu_custom_call.1} parent=1 // pred_fallthru
      _
    // Predicated region
    $region6: #{tpu_custom_call.1} parent=1 // pred_check
      _
    $region7: #{tpu_custom_call.1} parent=1 // pred_check_branch
      %34 = sbr.rel (0) target = $region9
    $region8: #{tpu_custom_call.1} parent=1 // pred_region
      _
    $region9: #{tpu_custom_call.1} parent=1 // pred_fallthru
      _
    // Predicated region
    $region10: #{tpu_custom_call.1} parent=1 // pred_check
      _
    $region11: #{tpu_custom_call.1} parent=1 // pred_check_branch
      %36 = sbr.rel (0) target = $region13
    $region12: #{tpu_custom_call.1} parent=1 // pred_region
      _
    $region13: #{tpu_custom_call.1} parent=1 // pred_fallthru
      _
    // Predicated region
    $region14: #{tpu_custom_call.1} parent=1 // pred_check
      _
    $region15: #{tpu_custom_call.1} parent=1 // pred_check_branch
      %38 = sbr.rel (0) target = $region17
    $region16: #{tpu_custom_call.1} parent=1 // pred_region
      _
    $region17: #{tpu_custom_call.1} parent=1 // pred_fallthru
      _
    // Predicated region
    $region18: #{tpu_custom_call.1} parent=1 // pred_check
      _
    $region19: #{tpu_custom_call.1} parent=1 // pred_check_branch
      %40 = sbr.rel (0) target = $region21
    $region20: #{tpu_custom_call.1} parent=1 // pred_region
      _
    $region21: #{tpu_custom_call.1} parent=1 // pred_fallthru
      _
    // Predicated region
    $region22: #{tpu_custom_call.1} parent=1 // pred_check
      _
    $region23: #{tpu_custom_call.1} parent=1 // pred_check_branch
      %42 = sbr.rel (0) target = $region25
    $region24: #{tpu_custom_call.1} parent=1 // pred_region
      _
    $region25: #{tpu_custom_call.1} parent=1 // pred_fallthru
      _
    // Predicated region
    $region26: #{tpu_custom_call.1} parent=1 // pred_check
      _
    $region27: #{tpu_custom_call.1} parent=1 // pred_check_branch
      %44 = sbr.rel (0) target = $region29
    $region28: #{tpu_custom_call.1} parent=1 // pred_region
      %s46 = ssub.s32 48, 48
      %47 = vsyncadd [#allocation7], %s46
      %s48 = sshll.u32 [#allocation6], 4
      %s49 = int_to_ptr.vmem [resolvable:$true] %s48
      %54 = dma.hbm_to_vmem [thread:$0]  %s8, 48, %s49, [#allocation7], 16, 16, 1
    $region29: #{tpu_custom_call.1} parent=1 // pred_fallthru
      _
    // Predicated region
    $region30: #{tpu_custom_call.1} parent=1 // pred_check
      _
    $region31: #{tpu_custom_call.1} parent=1 // pred_check_branch
      %56 = sbr.rel (0) target = $region33
    $region32: #{tpu_custom_call.1} parent=1 // pred_region
      _
    $region33: #{tpu_custom_call.1} parent=1 // pred_fallthru
      _
    // Predicated region
    $region34: #{tpu_custom_call.1} parent=1 // pred_check
      _
    $region35: #{tpu_custom_call.1} parent=1 // pred_check_branch
      %58 = sbr.rel (0) target = $region37
    $region36: #{tpu_custom_call.1} parent=1 // pred_region
      _
    $region37: #{tpu_custom_call.1} parent=1 // pred_fallthru
      _
    // Predicated region
    $region38: #{tpu_custom_call.1} parent=1 // pred_check
      _
    $region39: #{tpu_custom_call.1} parent=1 // pred_check_branch
      %60 = sbr.rel (0) target = $region41
    $region40: #{tpu_custom_call.1} parent=1 // pred_region
      _
    $region41: #{tpu_custom_call.1} parent=1 // pred_fallthru
      _
    // Predicated region
    $region42: #{tpu_custom_call.1} parent=1 // pred_check
      _
    $region43: #{tpu_custom_call.1} parent=1 // pred_check_branch
      %62 = sbr.rel (0) target = $region45
    $region44: #{tpu_custom_call.1} parent=1 // pred_region
      _
    $region45: #{tpu_custom_call.1} parent=1 // pred_fallthru
      _
    // Predicated region
    $region46: #{tpu_custom_call.1} parent=1 // pred_check
      _
    $region47: #{tpu_custom_call.1} parent=1 // pred_check_branch
      %64 = sbr.rel (0) target = $region49
    $region48: #{tpu_custom_call.1} parent=1 // pred_region
      _
    $region49: #{tpu_custom_call.1} parent=1 // pred_fallthru
      _
    // Predicated region
    $region50: #{tpu_custom_call.1} parent=1 // pred_check
      _
    $region51: #{tpu_custom_call.1} parent=1 // pred_check_branch
      %66 = sbr.rel (0) target = $region53
    $region52: #{tpu_custom_call.1} parent=1 // pred_region
      %67 = dma.done [#allocation7], 48
    $region53: #{tpu_custom_call.1} parent=1 // pred_fallthru
      _
    %p68 = scmp.eq.s32.totalorder 0, 0
    // Predicated region
    $region54: #{tpu_custom_call.1} parent=1 // pred_check
      %p69 = pneg %p68
    $region55: #{tpu_custom_call.1} parent=1 // pred_check_branch
      %71 = sbr.rel (%p69) target = $region57
    $region56: #{tpu_custom_call.1} parent=1 // pred_region
      %72 = vst [vmem:[#allocation2] sm:$0xff] 0.0
      %73 = vst [vmem:[#allocation2 + $0x8] sm:$0xff] 0.0
      %74 = vst [vmem:[#allocation2 + $0x10] sm:$0xff] 0.0
    $region57: #{tpu_custom_call.1} parent=1 // pred_fallthru
      _
    %v75 = vld [vmem:[#allocation2] sm:$0xff]
    %v76 = vld [vmem:[#allocation2 + $0x8] sm:$0xff]
    %v77 = vld [vmem:[#allocation2 + $0x10] sm:$0xff]
    %v78 = vld [vmem:[%s2] sm:$0xf]
    %v79 = vld [vmem:[%s2 + $0x8] sm:$0xf]
    %v80 = vld [vmem:[%s2 + $0x10] sm:$0xf]
    %v81 = vunpack.c.l.bf16 %v78
    %v82 = vunpack.c.l.bf16 %v79
    %v83 = vunpack.c.l.bf16 %v80
    %v84 = vadd.f32 %v75, %v81
    %v85 = vadd.f32 %v76, %v82
    %v86 = vadd.f32 %v77, %v83
    %v87 = vld [vmem:[%s2 + $0x4] sm:$0xf]
    %v88 = vld [vmem:[%s2 + $0xc] sm:$0xf]
    %v89 = vld [vmem:[%s2 + $0x14] sm:$0xf]
    %v90 = vunpack.c.l.bf16 %v87
    %v91 = vunpack.c.l.bf16 %v88
    %v92 = vunpack.c.l.bf16 %v89
    %v93 = vadd.f32 %v84, %v90
    %v94 = vadd.f32 %v85, %v91
    %v95 = vadd.f32 %v86, %v92
    %96 = vst [vmem:[#allocation2] sm:$0xff] %v93
    %97 = vst [vmem:[#allocation2 + $0x8] sm:$0xff] %v94
    %98 = vst [vmem:[#allocation2 + $0x10] sm:$0xff] %v95
    // Predicated region
    $region58: #{tpu_custom_call.1} parent=1 // pred_check
      %p99 = pneg %p68
    $region59: #{tpu_custom_call.1} parent=1 // pred_check_branch
      %101 = sbr.rel (%p99) target = $region61
    $region60: #{tpu_custom_call.1} parent=1 // pred_region
      %v102 = vld [vmem:[#allocation2] sm:$0xff]
      %v103 = vld [vmem:[#allocation2 + $0x8] sm:$0xff]
      %v104 = vld [vmem:[#allocation2 + $0x10] sm:$0xff]
      %105 = vadd.xlane.f32.xlu0 %v102
      %v106 = vpop.xlane.xlu0 %105
      %107 = vadd.xlane.f32.xlu0 %v103
      %v108 = vpop.xlane.xlu0 %107
      %109 = vadd.xlane.f32.xlu0 %v104
      %v110 = vpop.xlane.xlu0 %109
      %v111 = vld [vmem:[%s13] sm:$0xff]
      %v112 = vld [vmem:[%s13 + $0x8] sm:$0xff]
      %v113 = vld [vmem:[%s13 + $0x10] sm:$0xff]
      %v114 = vmul.f32 %v111, %v106
      %v115 = vmul.f32 %v112, %v108
      %v116 = vmul.f32 %v113, %v110
      %v117 = vld [vmem:[%s12] sm:$0x3f]
      %vm118 = vcmask 195584
      %v120 = vsel %vm118, %v117, 0
      %122 = vmatprep.subr.mxu0 0.0
      %123 = vmatpush1.msra.mxu0 0.0
      %124 = vmatprep.subr.mxu0 0.0
      %125 = vmatpush1.msra.mxu0 0.0
      %126 = vmatprep.subr.mxu0 0.0
      %127 = vmatpush1.msra.mxu0 0.0
      %128 = vmatprep.subr.mxu0 0.0
      %129 = vmatpush1.msra.mxu0 0.0
      %130 = vmatprep.subr.mxu0 0.0
      %131 = vmatpush1.msra.mxu0 0.0
      %132 = vmatprep.subr.mxu0 0.0
      %133 = vmatpush1.msra.mxu0 0.0
      %134 = vmatprep.subr.mxu0 0.0
      %135 = vmatpush1.msra.mxu0 0.0
      %136 = vmatprep.subr.mxu0 0.0
      %137 = vmatpush1.msra.mxu0 0.0
      %138 = vmatprep.subr.mxu0 0.0
      %139 = vmatpush1.msra.mxu0 0.0
      %140 = vmatprep.subr.mxu0 0.0
      %141 = vmatpush1.msra.mxu0 0.0
      %142 = vmatprep.subr.mxu0 0.0
      %143 = vmatpush1.msra.mxu0 0.0
      %144 = vmatprep.subr.mxu0 0.0
      %145 = vmatpush1.msra.mxu0 0.0
      %146 = vmatprep.subr.mxu0 0.0
      %147 = vmatpush1.msra.mxu0 0.0
      %148 = vmatprep.subr.mxu0 0.0
      %149 = vmatpush1.msra.mxu0 %v116
      %150 = vmatprep.subr.mxu0 0.0
      %151 = vmatpush1.msra.mxu0 %v115
      %152 = vmatprep.subr.mxu0 0.0
      %153 = vmatpush1.msra.mxu0 %v114
      %154 = vmatprep.subr.mxu0 0.0
      %155 = vmatpush2.msra.mxu0 0.0
      %156 = vmatprep.subr.mxu0 0.0
      %157 = vmatpush2.msra.mxu0 0.0
      %158 = vmatprep.subr.mxu0 0.0
      %159 = vmatpush2.msra.mxu0 0.0
      %160 = vmatprep.subr.mxu0 0.0
      %161 = vmatpush2.msra.mxu0 0.0
      %162 = vmatprep.subr.mxu0 0.0
      %163 = vmatpush2.msra.mxu0 0.0
      %164 = vmatprep.subr.mxu0 0.0
      %165 = vmatpush2.msra.mxu0 0.0
      %166 = vmatprep.subr.mxu0 0.0
      %167 = vmatpush2.msra.mxu0 0.0
      %168 = vmatprep.subr.mxu0 0.0
      %169 = vmatpush2.msra.mxu0 0.0
      %170 = vmatprep.subr.mxu0 0.0
      %171 = vmatpush2.msra.mxu0 0.0
      %172 = vmatprep.subr.mxu0 0.0
      %173 = vmatpush2.msra.mxu0 0.0
      %174 = vmatprep.subr.mxu0 0.0
      %175 = vmatpush2.msra.mxu0 0.0
      %176 = vmatprep.subr.mxu0 0.0
      %177 = vmatpush2.msra.mxu0 0.0
      %178 = vmatprep.subr.mxu0 0.0
      %179 = vmatpush2.msra.mxu0 0.0
      %180 = vmatprep.subr.mxu0 0.0
      %181 = vmatpush2.msra.mxu0 0.0
      %182 = vmatprep.subr.mxu0 0.0
      %183 = vmatpush2.msra.mxu0 0.0
      %184 = vmatprep.subr.mxu0 0.0
      %185 = vmatpush2.msra.mxu0 0.0
      %186 = vmatprep.mubr.f32.mxu0 0.0
      %187 = vmatmul.mubr.f32.gmra.mxu0 %v120
      %v188 = vpop.f32.mrf.mxu0
      %v189 = vadd.f32 0.0, %v188
      %v190 = vpop.f32.mrf.mxu0
      %191 = vdwg.mxu0
      %v192 = vmul.f32 %v189, 0.00390625
      %v193 = vld [vmem:[%s3] sm:$0xf]
      %v194 = vld [vmem:[%s4] sm:$0x1]
      %v196 = vlaneseq
      %v197 = vshrl.u32 %v196, 7
      %v198 = vsub.s32 0, %v197
      %v199 = vrot.slane %v194, %v198
      %vm201 = vcmask 31744
      %v203 = vsel %vm201, %v192, 0
      %vm205 = vcmask 1043456
      %v207 = vsel %vm205, %v193, 0
      %209 = vmatprep.subr.mxu0 0.0
      %210 = vmatpush1.msra.mxu0 0.0
      %211 = vmatprep.subr.mxu0 0.0
      %212 = vmatpush1.msra.mxu0 0.0
      %213 = vmatprep.subr.mxu0 0.0
      %214 = vmatpush1.msra.mxu0 0.0
      %215 = vmatprep.subr.mxu0 0.0
      %216 = vmatpush1.msra.mxu0 0.0
      %217 = vmatprep.subr.mxu0 0.0
      %218 = vmatpush1.msra.mxu0 0.0
      %219 = vmatprep.subr.mxu0 0.0
      %220 = vmatpush1.msra.mxu0 0.0
      %221 = vmatprep.subr.mxu0 0.0
      %222 = vmatpush1.msra.mxu0 0.0
      %223 = vmatprep.subr.mxu0 0.0
      %224 = vmatpush1.msra.mxu0 0.0
      %225 = vmatprep.subr.mxu0 0.0
      %226 = vmatpush1.msra.mxu0 0.0
      %227 = vmatprep.subr.mxu0 0.0
      %228 = vmatpush1.msra.mxu0 0.0
      %229 = vmatprep.subr.mxu0 0.0
      %230 = vmatpush1.msra.mxu0 0.0
      %231 = vmatprep.subr.mxu0 0.0
      %232 = vmatpush1.msra.mxu0 0.0
      %233 = vmatprep.subr.mxu0 0.0
      %234 = vmatpush1.msra.mxu0 0.0
      %235 = vmatprep.subr.mxu0 0.0
      %236 = vmatpush1.msra.mxu0 0.0
      %237 = vmatprep.subr.mxu0 0.0
      %238 = vmatpush1.msra.mxu0 0.0
      %239 = vmatprep.subr.mxu0 0.0
      %240 = vmatpush1.msra.mxu0 %v207
      %241 = vmatprep.subr.mxu0 0.0
      %242 = vmatpush2.msra.mxu0 0.0
      %243 = vmatprep.subr.mxu0 0.0
      %244 = vmatpush2.msra.mxu0 0.0
      %245 = vmatprep.subr.mxu0 0.0
      %246 = vmatpush2.msra.mxu0 0.0
      %247 = vmatprep.subr.mxu0 0.0
      %248 = vmatpush2.msra.mxu0 0.0
      %249 = vmatprep.subr.mxu0 0.0
      %250 = vmatpush2.msra.mxu0 0.0
      %251 = vmatprep.subr.mxu0 0.0
      %252 = vmatpush2.msra.mxu0 0.0
      %253 = vmatprep.subr.mxu0 0.0
      %254 = vmatpush2.msra.mxu0 0.0
      %255 = vmatprep.subr.mxu0 0.0
      %256 = vmatpush2.msra.mxu0 0.0
      %257 = vmatprep.subr.mxu0 0.0
      %258 = vmatpush2.msra.mxu0 0.0
      %259 = vmatprep.subr.mxu0 0.0
      %260 = vmatpush2.msra.mxu0 0.0
      %261 = vmatprep.subr.mxu0 0.0
      %262 = vmatpush2.msra.mxu0 0.0
      %263 = vmatprep.subr.mxu0 0.0
      %264 = vmatpush2.msra.mxu0 0.0
      %265 = vmatprep.subr.mxu0 0.0
      %266 = vmatpush2.msra.mxu0 0.0
      %267 = vmatprep.subr.mxu0 0.0
      %268 = vmatpush2.msra.mxu0 0.0
      %269 = vmatprep.subr.mxu0 0.0
      %270 = vmatpush2.msra.mxu0 0.0
      %271 = vmatprep.subr.mxu0 0.0
      %272 = vmatpush2.msra.mxu0 0.0
      %273 = vmatprep.mubr.f32.mxu0 0.0
      %274 = vmatmul.mubr.f32.gmra.mxu0 %v203
      %v275 = vpop.f32.mrf.mxu0
      %v276 = vadd.f32 %v199, %v275
      %v277 = vpop.f32.mrf.mxu0
      %278 = vdwg.mxu0
      %v279 = vld [vmem:[%s5] sm:$0xff]
      %v280 = vld [vmem:[%s5 + $0x8] sm:$0xff]
      %v281 = vld [vmem:[%s5 + $0x10] sm:$0xff]
      %v282 = vld [vmem:[%s5 + $0x18] sm:$0xff]
      %v283 = vld [vmem:[%s6] sm:$0x1]
      %v285 = vlaneseq
      %v286 = vshrl.u32 %v285, 7
      %v287 = vsub.s32 0, %v286
      %v288 = vrot.slane %v283, %v287
      %vm290 = vcmask 261120
      %v292 = vsel %vm290, %v276, 0
      %294 = vmatprep.subr.mxu0 0.0
      %295 = vmatpush1.msra.mxu0 0.0
      %296 = vmatprep.subr.mxu0 0.0
      %297 = vmatpush1.msra.mxu0 0.0
      %298 = vmatprep.subr.mxu0 0.0
      %299 = vmatpush1.msra.mxu0 0.0
      %300 = vmatprep.subr.mxu0 0.0
      %301 = vmatpush1.msra.mxu0 0.0
      %302 = vmatprep.subr.mxu0 0.0
      %303 = vmatpush1.msra.mxu0 0.0
      %304 = vmatprep.subr.mxu0 0.0
      %305 = vmatpush1.msra.mxu0 0.0
      %306 = vmatprep.subr.mxu0 0.0
      %307 = vmatpush1.msra.mxu0 0.0
      %308 = vmatprep.subr.mxu0 0.0
      %309 = vmatpush1.msra.mxu0 0.0
      %310 = vmatprep.subr.mxu0 0.0
      %311 = vmatpush1.msra.mxu0 0.0
      %312 = vmatprep.subr.mxu0 0.0
      %313 = vmatpush1.msra.mxu0 0.0
      %314 = vmatprep.subr.mxu0 0.0
      %315 = vmatpush1.msra.mxu0 0.0
      %316 = vmatprep.subr.mxu0 0.0
      %317 = vmatpush1.msra.mxu0 0.0
      %318 = vmatprep.subr.mxu0 0.0
      %319 = vmatpush1.msra.mxu0 %v282
      %320 = vmatprep.subr.mxu0 0.0
      %321 = vmatpush1.msra.mxu0 %v281
      %322 = vmatprep.subr.mxu0 0.0
      %323 = vmatpush1.msra.mxu0 %v280
      %324 = vmatprep.subr.mxu0 0.0
      %325 = vmatpush1.msra.mxu0 %v279
      %326 = vmatprep.subr.mxu0 0.0
      %327 = vmatpush2.msra.mxu0 0.0
      %328 = vmatprep.subr.mxu0 0.0
      %329 = vmatpush2.msra.mxu0 0.0
      %330 = vmatprep.subr.mxu0 0.0
      %331 = vmatpush2.msra.mxu0 0.0
      %332 = vmatprep.subr.mxu0 0.0
      %333 = vmatpush2.msra.mxu0 0.0
      %334 = vmatprep.subr.mxu0 0.0
      %335 = vmatpush2.msra.mxu0 0.0
      %336 = vmatprep.subr.mxu0 0.0
      %337 = vmatpush2.msra.mxu0 0.0
      %338 = vmatprep.subr.mxu0 0.0
      %339 = vmatpush2.msra.mxu0 0.0
      %340 = vmatprep.subr.mxu0 0.0
      %341 = vmatpush2.msra.mxu0 0.0
      %342 = vmatprep.subr.mxu0 0.0
      %343 = vmatpush2.msra.mxu0 0.0
      %344 = vmatprep.subr.mxu0 0.0
      %345 = vmatpush2.msra.mxu0 0.0
      %346 = vmatprep.subr.mxu0 0.0
      %347 = vmatpush2.msra.mxu0 0.0
      %348 = vmatprep.subr.mxu0 0.0
      %349 = vmatpush2.msra.mxu0 0.0
      %350 = vmatprep.subr.mxu0 0.0
      %351 = vmatpush2.msra.mxu0 0.0
      %352 = vmatprep.subr.mxu0 0.0
      %353 = vmatpush2.msra.mxu0 0.0
      %354 = vmatprep.subr.mxu0 0.0
      %355 = vmatpush2.msra.mxu0 0.0
      %356 = vmatprep.subr.mxu0 0.0
      %357 = vmatpush2.msra.mxu0 0.0
      %358 = vmatprep.mubr.f32.mxu0 0.0
      %359 = vmatmul.mubr.f32.gmra.mxu0 %v292
      %v360 = vpop.f32.mrf.mxu0
      %v361 = vadd.f32 %v288, %v360
      %v362 = vpop.f32.mrf.mxu0
      %363 = vdwg.mxu0
      %v364 = vmax.f32 %v361, 0.0
      %v365 = vld [vmem:[%s7] sm:$0xff]
      %v366 = vld [vmem:[%s7 + $0x8] sm:$0xff]
      %v367 = vld [vmem:[%s7 + $0x10] sm:$0xff]
      %v368 = vld [vmem:[%s7 + $0x18] sm:$0xff]
      %v369 = vld [vmem:[#allocation6] sm:$0x1]
      %v371 = vlaneseq
      %v372 = vshrl.u32 %v371, 7
      %v373 = vsub.s32 0, %v372
      %v374 = vrot.slane %v369, %v373
      %v377 = vsel %vm290, %v364, 0
      %379 = vmatprep.subr.mxu0 0.0
      %380 = vmatpush1.msra.mxu0 0.0
      %381 = vmatprep.subr.mxu0 0.0
      %382 = vmatpush1.msra.mxu0 0.0
      %383 = vmatprep.subr.mxu0 0.0
      %384 = vmatpush1.msra.mxu0 0.0
      %385 = vmatprep.subr.mxu0 0.0
      %386 = vmatpush1.msra.mxu0 0.0
      %387 = vmatprep.subr.mxu0 0.0
      %388 = vmatpush1.msra.mxu0 0.0
      %389 = vmatprep.subr.mxu0 0.0
      %390 = vmatpush1.msra.mxu0 0.0
      %391 = vmatprep.subr.mxu0 0.0
      %392 = vmatpush1.msra.mxu0 0.0
      %393 = vmatprep.subr.mxu0 0.0
      %394 = vmatpush1.msra.mxu0 0.0
      %395 = vmatprep.subr.mxu0 0.0
      %396 = vmatpush1.msra.mxu0 0.0
      %397 = vmatprep.subr.mxu0 0.0
      %398 = vmatpush1.msra.mxu0 0.0
      %399 = vmatprep.subr.mxu0 0.0
      %400 = vmatpush1.msra.mxu0 0.0
      %401 = vmatprep.subr.mxu0 0.0
      %402 = vmatpush1.msra.mxu0 0.0
      %403 = vmatprep.subr.mxu0 0.0
      %404 = vmatpush1.msra.mxu0 %v368
      %405 = vmatprep.subr.mxu0 0.0
      %406 = vmatpush1.msra.mxu0 %v367
      %407 = vmatprep.subr.mxu0 0.0
      %408 = vmatpush1.msra.mxu0 %v366
      %409 = vmatprep.subr.mxu0 0.0
      %410 = vmatpush1.msra.mxu0 %v365
      %411 = vmatprep.subr.mxu0 0.0
      %412 = vmatpush2.msra.mxu0 0.0
      %413 = vmatprep.subr.mxu0 0.0
      %414 = vmatpush2.msra.mxu0 0.0
      %415 = vmatprep.subr.mxu0 0.0
      %416 = vmatpush2.msra.mxu0 0.0
      %417 = vmatprep.subr.mxu0 0.0
      %418 = vmatpush2.msra.mxu0 0.0
      %419 = vmatprep.subr.mxu0 0.0
      %420 = vmatpush2.msra.mxu0 0.0
      %421 = vmatprep.subr.mxu0 0.0
      %422 = vmatpush2.msra.mxu0 0.0
      %423 = vmatprep.subr.mxu0 0.0
      %424 = vmatpush2.msra.mxu0 0.0
      %425 = vmatprep.subr.mxu0 0.0
      %426 = vmatpush2.msra.mxu0 0.0
      %427 = vmatprep.subr.mxu0 0.0
      %428 = vmatpush2.msra.mxu0 0.0
      %429 = vmatprep.subr.mxu0 0.0
      %430 = vmatpush2.msra.mxu0 0.0
      %431 = vmatprep.subr.mxu0 0.0
      %432 = vmatpush2.msra.mxu0 0.0
      %433 = vmatprep.subr.mxu0 0.0
      %434 = vmatpush2.msra.mxu0 0.0
      %435 = vmatprep.subr.mxu0 0.0
      %436 = vmatpush2.msra.mxu0 0.0
      %437 = vmatprep.subr.mxu0 0.0
      %438 = vmatpush2.msra.mxu0 0.0
      %439 = vmatprep.subr.mxu0 0.0
      %440 = vmatpush2.msra.mxu0 0.0
      %441 = vmatprep.subr.mxu0 0.0
      %442 = vmatpush2.msra.mxu0 0.0
      %443 = vmatprep.mubr.f32.mxu0 0.0
      %444 = vmatmul.mubr.f32.gmra.mxu0 %v377
      %v445 = vpop.f32.mrf.mxu0
      %v446 = vadd.f32 %v374, %v445
      %v447 = vpop.f32.mrf.mxu0
      %448 = vdwg.mxu0
      %v449 = vmul.f32 %v446, %v446
      %vm450 = vcmask 123904
      %v451 = vsel %vm450, %v449, 0.0
      %452 = vadd.xlane.f32.xlu0 %v451
      %v453 = vpop.xlane.xlu0 %452
      %v454 = vrsqrt.pop %v453
      %v455 = vmul.f32 %v453, %v454
      %vm456 = vcmp.eq.f32.partialorder %v453, inf
      %v457 = vsel %vm456, %v453, %v455
      %vm458 = vcmp.eq.f32.partialorder %v453, 0.0
      %v459 = vand.u32 %v453, 2147483648
      %v460 = vsel %vm458, %v459, %v457
      %v461 = vmax.f32 %v460, 1e-12
      %v462 = vrcp.pop %v461
      %v463 = vmul.f32 %v446, %v462
      %s464 = scalar_lea.vmem %s3, 4
      %v465 = vld [vmem:[%s464] sm:$0xf]
      %s466 = scalar_lea.vmem %s4, 1
      %v467 = vld [vmem:[%s466] sm:$0x1]
      %v469 = vlaneseq
      %v470 = vshrl.u32 %v469, 7
      %v471 = vsub.s32 0, %v470
      %v472 = vrot.slane %v467, %v471
      %v474 = vrot.slane %v192, 2
      %v475 = vsel %vm201, %v474, 0
      %v478 = vsel %vm205, %v465, 0
      %480 = vmatprep.subr.mxu0 0.0
      %481 = vmatpush1.msra.mxu0 0.0
      %482 = vmatprep.subr.mxu0 0.0
      %483 = vmatpush1.msra.mxu0 0.0
      %484 = vmatprep.subr.mxu0 0.0
      %485 = vmatpush1.msra.mxu0 0.0
      %486 = vmatprep.subr.mxu0 0.0
      %487 = vmatpush1.msra.mxu0 0.0
      %488 = vmatprep.subr.mxu0 0.0
      %489 = vmatpush1.msra.mxu0 0.0
      %490 = vmatprep.subr.mxu0 0.0
      %491 = vmatpush1.msra.mxu0 0.0
      %492 = vmatprep.subr.mxu0 0.0
      %493 = vmatpush1.msra.mxu0 0.0
      %494 = vmatprep.subr.mxu0 0.0
      %495 = vmatpush1.msra.mxu0 0.0
      %496 = vmatprep.subr.mxu0 0.0
      %497 = vmatpush1.msra.mxu0 0.0
      %498 = vmatprep.subr.mxu0 0.0
      %499 = vmatpush1.msra.mxu0 0.0
      %500 = vmatprep.subr.mxu0 0.0
      %501 = vmatpush1.msra.mxu0 0.0
      %502 = vmatprep.subr.mxu0 0.0
      %503 = vmatpush1.msra.mxu0 0.0
      %504 = vmatprep.subr.mxu0 0.0
      %505 = vmatpush1.msra.mxu0 0.0
      %506 = vmatprep.subr.mxu0 0.0
      %507 = vmatpush1.msra.mxu0 0.0
      %508 = vmatprep.subr.mxu0 0.0
      %509 = vmatpush1.msra.mxu0 0.0
      %510 = vmatprep.subr.mxu0 0.0
      %511 = vmatpush1.msra.mxu0 %v478
      %512 = vmatprep.subr.mxu0 0.0
      %513 = vmatpush2.msra.mxu0 0.0
      %514 = vmatprep.subr.mxu0 0.0
      %515 = vmatpush2.msra.mxu0 0.0
      %516 = vmatprep.subr.mxu0 0.0
      %517 = vmatpush2.msra.mxu0 0.0
      %518 = vmatprep.subr.mxu0 0.0
      %519 = vmatpush2.msra.mxu0 0.0
      %520 = vmatprep.subr.mxu0 0.0
      %521 = vmatpush2.msra.mxu0 0.0
      %522 = vmatprep.subr.mxu0 0.0
      %523 = vmatpush2.msra.mxu0 0.0
      %524 = vmatprep.subr.mxu0 0.0
      %525 = vmatpush2.msra.mxu0 0.0
      %526 = vmatprep.subr.mxu0 0.0
      %527 = vmatpush2.msra.mxu0 0.0
      %528 = vmatprep.subr.mxu0 0.0
      %529 = vmatpush2.msra.mxu0 0.0
      %530 = vmatprep.subr.mxu0 0.0
      %531 = vmatpush2.msra.mxu0 0.0
      %532 = vmatprep.subr.mxu0 0.0
      %533 = vmatpush2.msra.mxu0 0.0
      %534 = vmatprep.subr.mxu0 0.0
      %535 = vmatpush2.msra.mxu0 0.0
      %536 = vmatprep.subr.mxu0 0.0
      %537 = vmatpush2.msra.mxu0 0.0
      %538 = vmatprep.subr.mxu0 0.0
      %539 = vmatpush2.msra.mxu0 0.0
      %540 = vmatprep.subr.mxu0 0.0
      %541 = vmatpush2.msra.mxu0 0.0
      %542 = vmatprep.subr.mxu0 0.0
      %543 = vmatpush2.msra.mxu0 0.0
      %544 = vmatprep.mubr.f32.mxu0 0.0
      %545 = vmatmul.mubr.f32.gmra.mxu0 %v475
      %v546 = vpop.f32.mrf.mxu0
      %v547 = vadd.f32 %v472, %v546
      %v548 = vpop.f32.mrf.mxu0
      %549 = vdwg.mxu0
      %s550 = scalar_lea.vmem %s5, 32
      %v551 = vld [vmem:[%s550] sm:$0xff]
      %v552 = vld [vmem:[%s550 + $0x8] sm:$0xff]
      %v553 = vld [vmem:[%s550 + $0x10] sm:$0xff]
      %v554 = vld [vmem:[%s550 + $0x18] sm:$0xff]
      %s555 = scalar_lea.vmem %s6, 1
      %v556 = vld [vmem:[%s555] sm:$0x1]
      %v558 = vlaneseq
      %v559 = vshrl.u32 %v558, 7
      %v560 = vsub.s32 0, %v559
      %v561 = vrot.slane %v556, %v560
      %v564 = vsel %vm290, %v547, 0
      %566 = vmatprep.subr.mxu0 0.0
      %567 = vmatpush1.msra.mxu0 0.0
      %568 = vmatprep.subr.mxu0 0.0
      %569 = vmatpush1.msra.mxu0 0.0
      %570 = vmatprep.subr.mxu0 0.0
      %571 = vmatpush1.msra.mxu0 0.0
      %572 = vmatprep.subr.mxu0 0.0
      %573 = vmatpush1.msra.mxu0 0.0
      %574 = vmatprep.subr.mxu0 0.0
      %575 = vmatpush1.msra.mxu0 0.0
      %576 = vmatprep.subr.mxu0 0.0
      %577 = vmatpush1.msra.mxu0 0.0
      %578 = vmatprep.subr.mxu0 0.0
      %579 = vmatpush1.msra.mxu0 0.0
      %580 = vmatprep.subr.mxu0 0.0
      %581 = vmatpush1.msra.mxu0 0.0
      %582 = vmatprep.subr.mxu0 0.0
      %583 = vmatpush1.msra.mxu0 0.0
      %584 = vmatprep.subr.mxu0 0.0
      %585 = vmatpush1.msra.mxu0 0.0
      %586 = vmatprep.subr.mxu0 0.0
      %587 = vmatpush1.msra.mxu0 0.0
      %588 = vmatprep.subr.mxu0 0.0
      %589 = vmatpush1.msra.mxu0 0.0
      %590 = vmatprep.subr.mxu0 0.0
      %591 = vmatpush1.msra.mxu0 %v554
      %592 = vmatprep.subr.mxu0 0.0
      %593 = vmatpush1.msra.mxu0 %v553
      %594 = vmatprep.subr.mxu0 0.0
      %595 = vmatpush1.msra.mxu0 %v552
      %596 = vmatprep.subr.mxu0 0.0
      %597 = vmatpush1.msra.mxu0 %v551
      %598 = vmatprep.subr.mxu0 0.0
      %599 = vmatpush2.msra.mxu0 0.0
      %600 = vmatprep.subr.mxu0 0.0
      %601 = vmatpush2.msra.mxu0 0.0
      %602 = vmatprep.subr.mxu0 0.0
      %603 = vmatpush2.msra.mxu0 0.0
      %604 = vmatprep.subr.mxu0 0.0
      %605 = vmatpush2.msra.mxu0 0.0
      %606 = vmatprep.subr.mxu0 0.0
      %607 = vmatpush2.msra.mxu0 0.0
      %608 = vmatprep.subr.mxu0 0.0
      %609 = vmatpush2.msra.mxu0 0.0
      %610 = vmatprep.subr.mxu0 0.0
      %611 = vmatpush2.msra.mxu0 0.0
      %612 = vmatprep.subr.mxu0 0.0
      %613 = vmatpush2.msra.mxu0 0.0
      %614 = vmatprep.subr.mxu0 0.0
      %615 = vmatpush2.msra.mxu0 0.0
      %616 = vmatprep.subr.mxu0 0.0
      %617 = vmatpush2.msra.mxu0 0.0
      %618 = vmatprep.subr.mxu0 0.0
      %619 = vmatpush2.msra.mxu0 0.0
      %620 = vmatprep.subr.mxu0 0.0
      %621 = vmatpush2.msra.mxu0 0.0
      %622 = vmatprep.subr.mxu0 0.0
      %623 = vmatpush2.msra.mxu0 0.0
      %624 = vmatprep.subr.mxu0 0.0
      %625 = vmatpush2.msra.mxu0 0.0
      %626 = vmatprep.subr.mxu0 0.0
      %627 = vmatpush2.msra.mxu0 0.0
      %628 = vmatprep.subr.mxu0 0.0
      %629 = vmatpush2.msra.mxu0 0.0
      %630 = vmatprep.mubr.f32.mxu0 0.0
      %631 = vmatmul.mubr.f32.gmra.mxu0 %v564
      %v632 = vpop.f32.mrf.mxu0
      %v633 = vadd.f32 %v561, %v632
      %v634 = vpop.f32.mrf.mxu0
      %635 = vdwg.mxu0
      %v636 = vmax.f32 %v633, 0.0
      %s637 = scalar_lea.vmem %s7, 32
      %v638 = vld [vmem:[%s637] sm:$0xff]
      %v639 = vld [vmem:[%s637 + $0x8] sm:$0xff]
      %v640 = vld [vmem:[%s637 + $0x10] sm:$0xff]
      %v641 = vld [vmem:[%s637 + $0x18] sm:$0xff]
      %s642 = scalar_lea.vmem [#allocation6], 1
      %v643 = vld [vmem:[%s642] sm:$0x1]
      %v645 = vlaneseq
      %v646 = vshrl.u32 %v645, 7
      %v647 = vsub.s32 0, %v646
      %v648 = vrot.slane %v643, %v647
      %v651 = vsel %vm290, %v636, 0
      %653 = vmatprep.subr.mxu0 0.0
      %654 = vmatpush1.msra.mxu0 0.0
      %655 = vmatprep.subr.mxu0 0.0
      %656 = vmatpush1.msra.mxu0 0.0
      %657 = vmatprep.subr.mxu0 0.0
      %658 = vmatpush1.msra.mxu0 0.0
      %659 = vmatprep.subr.mxu0 0.0
      %660 = vmatpush1.msra.mxu0 0.0
      %661 = vmatprep.subr.mxu0 0.0
      %662 = vmatpush1.msra.mxu0 0.0
      %663 = vmatprep.subr.mxu0 0.0
      %664 = vmatpush1.msra.mxu0 0.0
      %665 = vmatprep.subr.mxu0 0.0
      %666 = vmatpush1.msra.mxu0 0.0
      %667 = vmatprep.subr.mxu0 0.0
      %668 = vmatpush1.msra.mxu0 0.0
      %669 = vmatprep.subr.mxu0 0.0
      %670 = vmatpush1.msra.mxu0 0.0
      %671 = vmatprep.subr.mxu0 0.0
      %672 = vmatpush1.msra.mxu0 0.0
      %673 = vmatprep.subr.mxu0 0.0
      %674 = vmatpush1.msra.mxu0 0.0
      %675 = vmatprep.subr.mxu0 0.0
      %676 = vmatpush1.msra.mxu0 0.0
      %677 = vmatprep.subr.mxu0 0.0
      %678 = vmatpush1.msra.mxu0 %v641
      %679 = vmatprep.subr.mxu0 0.0
      %680 = vmatpush1.msra.mxu0 %v640
      %681 = vmatprep.subr.mxu0 0.0
      %682 = vmatpush1.msra.mxu0 %v639
      %683 = vmatprep.subr.mxu0 0.0
      %684 = vmatpush1.msra.mxu0 %v638
      %685 = vmatprep.subr.mxu0 0.0
      %686 = vmatpush2.msra.mxu0 0.0
      %687 = vmatprep.subr.mxu0 0.0
      %688 = vmatpush2.msra.mxu0 0.0
      %689 = vmatprep.subr.mxu0 0.0
      %690 = vmatpush2.msra.mxu0 0.0
      %691 = vmatprep.subr.mxu0 0.0
      %692 = vmatpush2.msra.mxu0 0.0
      %693 = vmatprep.subr.mxu0 0.0
      %694 = vmatpush2.msra.mxu0 0.0
      %695 = vmatprep.subr.mxu0 0.0
      %696 = vmatpush2.msra.mxu0 0.0
      %697 = vmatprep.subr.mxu0 0.0
      %698 = vmatpush2.msra.mxu0 0.0
      %699 = vmatprep.subr.mxu0 0.0
      %700 = vmatpush2.msra.mxu0 0.0
      %701 = vmatprep.subr.mxu0 0.0
      %702 = vmatpush2.msra.mxu0 0.0
      %703 = vmatprep.subr.mxu0 0.0
      %704 = vmatpush2.msra.mxu0 0.0
      %705 = vmatprep.subr.mxu0 0.0
      %706 = vmatpush2.msra.mxu0 0.0
      %707 = vmatprep.subr.mxu0 0.0
      %708 = vmatpush2.msra.mxu0 0.0
      %709 = vmatprep.subr.mxu0 0.0
      %710 = vmatpush2.msra.mxu0 0.0
      %711 = vmatprep.subr.mxu0 0.0
      %712 = vmatpush2.msra.mxu0 0.0
      %713 = vmatprep.subr.mxu0 0.0
      %714 = vmatpush2.msra.mxu0 0.0
      %715 = vmatprep.subr.mxu0 0.0
      %716 = vmatpush2.msra.mxu0 0.0
      %717 = vmatprep.mubr.f32.mxu0 0.0
      %718 = vmatmul.mubr.f32.gmra.mxu0 %v651
      %v719 = vpop.f32.mrf.mxu0
      %v720 = vadd.f32 %v648, %v719
      %v721 = vpop.f32.mrf.mxu0
      %722 = vdwg.mxu0
      %v723 = vmul.f32 %v720, %v720
      %v724 = vsel %vm450, %v723, 0.0
      %725 = vadd.xlane.f32.xlu0 %v724
      %v726 = vpop.xlane.xlu0 %725
      %v727 = vrsqrt.pop %v726
      %v728 = vmul.f32 %v726, %v727
      %vm729 = vcmp.eq.f32.partialorder %v726, inf
      %v730 = vsel %vm729, %v726, %v728
      %vm731 = vcmp.eq.f32.partialorder %v726, 0.0
      %v732 = vand.u32 %v726, 2147483648
      %v733 = vsel %vm731, %v732, %v730
      %v734 = vmax.f32 %v733, 1e-12
      %v735 = vrcp.pop %v734
      %v736 = vmul.f32 %v720, %v735
      %s737 = scalar_lea.vmem %s3, 8
      %v738 = vld [vmem:[%s737] sm:$0xf]
      %s739 = scalar_lea.vmem %s4, 2
      %v740 = vld [vmem:[%s739] sm:$0x1]
      %v742 = vlaneseq
      %v743 = vshrl.u32 %v742, 7
      %v744 = vsub.s32 0, %v743
      %v745 = vrot.slane %v740, %v744
      %v747 = vrot.slane %v192, 4
      %v748 = vsel %vm201, %v747, 0
      %v751 = vsel %vm205, %v738, 0
      %753 = vmatprep.subr.mxu0 0.0
      %754 = vmatpush1.msra.mxu0 0.0
      %755 = vmatprep.subr.mxu0 0.0
      %756 = vmatpush1.msra.mxu0 0.0
      %757 = vmatprep.subr.mxu0 0.0
      %758 = vmatpush1.msra.mxu0 0.0
      %759 = vmatprep.subr.mxu0 0.0
      %760 = vmatpush1.msra.mxu0 0.0
      %761 = vmatprep.subr.mxu0 0.0
      %762 = vmatpush1.msra.mxu0 0.0
      %763 = vmatprep.subr.mxu0 0.0
      %764 = vmatpush1.msra.mxu0 0.0
      %765 = vmatprep.subr.mxu0 0.0
      %766 = vmatpush1.msra.mxu0 0.0
      %767 = vmatprep.subr.mxu0 0.0
      %768 = vmatpush1.msra.mxu0 0.0
      %769 = vmatprep.subr.mxu0 0.0
      %770 = vmatpush1.msra.mxu0 0.0
      %771 = vmatprep.subr.mxu0 0.0
      %772 = vmatpush1.msra.mxu0 0.0
      %773 = vmatprep.subr.mxu0 0.0
      %774 = vmatpush1.msra.mxu0 0.0
      %775 = vmatprep.subr.mxu0 0.0
      %776 = vmatpush1.msra.mxu0 0.0
      %777 = vmatprep.subr.mxu0 0.0
      %778 = vmatpush1.msra.mxu0 0.0
      %779 = vmatprep.subr.mxu0 0.0
      %780 = vmatpush1.msra.mxu0 0.0
      %781 = vmatprep.subr.mxu0 0.0
      %782 = vmatpush1.msra.mxu0 0.0
      %783 = vmatprep.subr.mxu0 0.0
      %784 = vmatpush1.msra.mxu0 %v751
      %785 = vmatprep.subr.mxu0 0.0
      %786 = vmatpush2.msra.mxu0 0.0
      %787 = vmatprep.subr.mxu0 0.0
      %788 = vmatpush2.msra.mxu0 0.0
      %789 = vmatprep.subr.mxu0 0.0
      %790 = vmatpush2.msra.mxu0 0.0
      %791 = vmatprep.subr.mxu0 0.0
      %792 = vmatpush2.msra.mxu0 0.0
      %793 = vmatprep.subr.mxu0 0.0
      %794 = vmatpush2.msra.mxu0 0.0
      %795 = vmatprep.subr.mxu0 0.0
      %796 = vmatpush2.msra.mxu0 0.0
      %797 = vmatprep.subr.mxu0 0.0
      %798 = vmatpush2.msra.mxu0 0.0
      %799 = vmatprep.subr.mxu0 0.0
      %800 = vmatpush2.msra.mxu0 0.0
      %801 = vmatprep.subr.mxu0 0.0
      %802 = vmatpush2.msra.mxu0 0.0
      %803 = vmatprep.subr.mxu0 0.0
      %804 = vmatpush2.msra.mxu0 0.0
      %805 = vmatprep.subr.mxu0 0.0
      %806 = vmatpush2.msra.mxu0 0.0
      %807 = vmatprep.subr.mxu0 0.0
      %808 = vmatpush2.msra.mxu0 0.0
      %809 = vmatprep.subr.mxu0 0.0
      %810 = vmatpush2.msra.mxu0 0.0
      %811 = vmatprep.subr.mxu0 0.0
      %812 = vmatpush2.msra.mxu0 0.0
      %813 = vmatprep.subr.mxu0 0.0
      %814 = vmatpush2.msra.mxu0 0.0
      %815 = vmatprep.subr.mxu0 0.0
      %816 = vmatpush2.msra.mxu0 0.0
      %817 = vmatprep.mubr.f32.mxu0 0.0
      %818 = vmatmul.mubr.f32.gmra.mxu0 %v748
      %v819 = vpop.f32.mrf.mxu0
      %v820 = vadd.f32 %v745, %v819
      %v821 = vpop.f32.mrf.mxu0
      %822 = vdwg.mxu0
      %s823 = scalar_lea.vmem %s5, 64
      %v824 = vld [vmem:[%s823] sm:$0xff]
      %v825 = vld [vmem:[%s823 + $0x8] sm:$0xff]
      %v826 = vld [vmem:[%s823 + $0x10] sm:$0xff]
      %v827 = vld [vmem:[%s823 + $0x18] sm:$0xff]
      %s828 = scalar_lea.vmem %s6, 2
      %v829 = vld [vmem:[%s828] sm:$0x1]
      %v831 = vlaneseq
      %v832 = vshrl.u32 %v831, 7
      %v833 = vsub.s32 0, %v832
      %v834 = vrot.slane %v829, %v833
      %v837 = vsel %vm290, %v820, 0
      %839 = vmatprep.subr.mxu0 0.0
      %840 = vmatpush1.msra.mxu0 0.0
      %841 = vmatprep.subr.mxu0 0.0
      %842 = vmatpush1.msra.mxu0 0.0
      %843 = vmatprep.subr.mxu0 0.0
      %844 = vmatpush1.msra.mxu0 0.0
      %845 = vmatprep.subr.mxu0 0.0
      %846 = vmatpush1.msra.mxu0 0.0
      %847 = vmatprep.subr.mxu0 0.0
      %848 = vmatpush1.msra.mxu0 0.0
      %849 = vmatprep.subr.mxu0 0.0
      %850 = vmatpush1.msra.mxu0 0.0
      %851 = vmatprep.subr.mxu0 0.0
      %852 = vmatpush1.msra.mxu0 0.0
      %853 = vmatprep.subr.mxu0 0.0
      %854 = vmatpush1.msra.mxu0 0.0
      %855 = vmatprep.subr.mxu0 0.0
      %856 = vmatpush1.msra.mxu0 0.0
      %857 = vmatprep.subr.mxu0 0.0
      %858 = vmatpush1.msra.mxu0 0.0
      %859 = vmatprep.subr.mxu0 0.0
      %860 = vmatpush1.msra.mxu0 0.0
      %861 = vmatprep.subr.mxu0 0.0
      %862 = vmatpush1.msra.mxu0 0.0
      %863 = vmatprep.subr.mxu0 0.0
      %864 = vmatpush1.msra.mxu0 %v827
      %865 = vmatprep.subr.mxu0 0.0
      %866 = vmatpush1.msra.mxu0 %v826
      %867 = vmatprep.subr.mxu0 0.0
      %868 = vmatpush1.msra.mxu0 %v825
      %869 = vmatprep.subr.mxu0 0.0
      %870 = vmatpush1.msra.mxu0 %v824
      %871 = vmatprep.subr.mxu0 0.0
      %872 = vmatpush2.msra.mxu0 0.0
      %873 = vmatprep.subr.mxu0 0.0
      %874 = vmatpush2.msra.mxu0 0.0
      %875 = vmatprep.subr.mxu0 0.0
      %876 = vmatpush2.msra.mxu0 0.0
      %877 = vmatprep.subr.mxu0 0.0
      %878 = vmatpush2.msra.mxu0 0.0
      %879 = vmatprep.subr.mxu0 0.0
      %880 = vmatpush2.msra.mxu0 0.0
      %881 = vmatprep.subr.mxu0 0.0
      %882 = vmatpush2.msra.mxu0 0.0
      %883 = vmatprep.subr.mxu0 0.0
      %884 = vmatpush2.msra.mxu0 0.0
      %885 = vmatprep.subr.mxu0 0.0
      %886 = vmatpush2.msra.mxu0 0.0
      %887 = vmatprep.subr.mxu0 0.0
      %888 = vmatpush2.msra.mxu0 0.0
      %889 = vmatprep.subr.mxu0 0.0
      %890 = vmatpush2.msra.mxu0 0.0
      %891 = vmatprep.subr.mxu0 0.0
      %892 = vmatpush2.msra.mxu0 0.0
      %893 = vmatprep.subr.mxu0 0.0
      %894 = vmatpush2.msra.mxu0 0.0
      %895 = vmatprep.subr.mxu0 0.0
      %896 = vmatpush2.msra.mxu0 0.0
      %897 = vmatprep.subr.mxu0 0.0
      %898 = vmatpush2.msra.mxu0 0.0
      %899 = vmatprep.subr.mxu0 0.0
      %900 = vmatpush2.msra.mxu0 0.0
      %901 = vmatprep.subr.mxu0 0.0
      %902 = vmatpush2.msra.mxu0 0.0
      %903 = vmatprep.mubr.f32.mxu0 0.0
      %904 = vmatmul.mubr.f32.gmra.mxu0 %v837
      %v905 = vpop.f32.mrf.mxu0
      %v906 = vadd.f32 %v834, %v905
      %v907 = vpop.f32.mrf.mxu0
      %908 = vdwg.mxu0
      %v909 = vmax.f32 %v906, 0.0
      %s910 = scalar_lea.vmem %s7, 64
      %v911 = vld [vmem:[%s910] sm:$0xff]
      %v912 = vld [vmem:[%s910 + $0x8] sm:$0xff]
      %v913 = vld [vmem:[%s910 + $0x10] sm:$0xff]
      %v914 = vld [vmem:[%s910 + $0x18] sm:$0xff]
      %s915 = scalar_lea.vmem [#allocation6], 2
      %v916 = vld [vmem:[%s915] sm:$0x1]
      %v918 = vlaneseq
      %v919 = vshrl.u32 %v918, 7
      %v920 = vsub.s32 0, %v919
      %v921 = vrot.slane %v916, %v920
      %v924 = vsel %vm290, %v909, 0
      %926 = vmatprep.subr.mxu0 0.0
      %927 = vmatpush1.msra.mxu0 0.0
      %928 = vmatprep.subr.mxu0 0.0
      %929 = vmatpush1.msra.mxu0 0.0
      %930 = vmatprep.subr.mxu0 0.0
      %931 = vmatpush1.msra.mxu0 0.0
      %932 = vmatprep.subr.mxu0 0.0
      %933 = vmatpush1.msra.mxu0 0.0
      %934 = vmatprep.subr.mxu0 0.0
      %935 = vmatpush1.msra.mxu0 0.0
      %936 = vmatprep.subr.mxu0 0.0
      %937 = vmatpush1.msra.mxu0 0.0
      %938 = vmatprep.subr.mxu0 0.0
      %939 = vmatpush1.msra.mxu0 0.0
      %940 = vmatprep.subr.mxu0 0.0
      %941 = vmatpush1.msra.mxu0 0.0
      %942 = vmatprep.subr.mxu0 0.0
      %943 = vmatpush1.msra.mxu0 0.0
      %944 = vmatprep.subr.mxu0 0.0
      %945 = vmatpush1.msra.mxu0 0.0
      %946 = vmatprep.subr.mxu0 0.0
      %947 = vmatpush1.msra.mxu0 0.0
      %948 = vmatprep.subr.mxu0 0.0
      %949 = vmatpush1.msra.mxu0 0.0
      %950 = vmatprep.subr.mxu0 0.0
      %951 = vmatpush1.msra.mxu0 %v914
      %952 = vmatprep.subr.mxu0 0.0
      %953 = vmatpush1.msra.mxu0 %v913
      %954 = vmatprep.subr.mxu0 0.0
      %955 = vmatpush1.msra.mxu0 %v912
      %956 = vmatprep.subr.mxu0 0.0
      %957 = vmatpush1.msra.mxu0 %v911
      %958 = vmatprep.subr.mxu0 0.0
      %959 = vmatpush2.msra.mxu0 0.0
      %960 = vmatprep.subr.mxu0 0.0
      %961 = vmatpush2.msra.mxu0 0.0
      %962 = vmatprep.subr.mxu0 0.0
      %963 = vmatpush2.msra.mxu0 0.0
      %964 = vmatprep.subr.mxu0 0.0
      %965 = vmatpush2.msra.mxu0 0.0
      %966 = vmatprep.subr.mxu0 0.0
      %967 = vmatpush2.msra.mxu0 0.0
      %968 = vmatprep.subr.mxu0 0.0
      %969 = vmatpush2.msra.mxu0 0.0
      %970 = vmatprep.subr.mxu0 0.0
      %971 = vmatpush2.msra.mxu0 0.0
      %972 = vmatprep.subr.mxu0 0.0
      %973 = vmatpush2.msra.mxu0 0.0
      %974 = vmatprep.subr.mxu0 0.0
      %975 = vmatpush2.msra.mxu0 0.0
      %976 = vmatprep.subr.mxu0 0.0
      %977 = vmatpush2.msra.mxu0 0.0
      %978 = vmatprep.subr.mxu0 0.0
      %979 = vmatpush2.msra.mxu0 0.0
      %980 = vmatprep.subr.mxu0 0.0
      %981 = vmatpush2.msra.mxu0 0.0
      %982 = vmatprep.subr.mxu0 0.0
      %983 = vmatpush2.msra.mxu0 0.0
      %984 = vmatprep.subr.mxu0 0.0
      %985 = vmatpush2.msra.mxu0 0.0
      %986 = vmatprep.subr.mxu0 0.0
      %987 = vmatpush2.msra.mxu0 0.0
      %988 = vmatprep.subr.mxu0 0.0
      %989 = vmatpush2.msra.mxu0 0.0
      %990 = vmatprep.mubr.f32.mxu0 0.0
      %991 = vmatmul.mubr.f32.gmra.mxu0 %v924
      %v992 = vpop.f32.mrf.mxu0
      %v993 = vadd.f32 %v921, %v992
      %v994 = vpop.f32.mrf.mxu0
      %995 = vdwg.mxu0
      %v996 = vmul.f32 %v993, %v993
      %v997 = vsel %vm450, %v996, 0.0
      %998 = vadd.xlane.f32.xlu0 %v997
      %v999 = vpop.xlane.xlu0 %998
      %v1000 = vrsqrt.pop %v999
      %v1001 = vmul.f32 %v999, %v1000
      %vm1002 = vcmp.eq.f32.partialorder %v999, inf
      %v1003 = vsel %vm1002, %v999, %v1001
      %vm1004 = vcmp.eq.f32.partialorder %v999, 0.0
      %v1005 = vand.u32 %v999, 2147483648
      %v1006 = vsel %vm1004, %v1005, %v1003
      %v1007 = vmax.f32 %v1006, 1e-12
      %v1008 = vrcp.pop %v1007
      %v1009 = vmul.f32 %v993, %v1008
      %v1010 = vlaneseq
      %v1011 = vand.u32 %v1010, 127
      %v1012 = vmul.f32 %v463, %v736
      %v1013 = vsel %vm450, %v1012, 0.0
      %1014 = vadd.xlane.f32.xlu0 %v1013
      %v1015 = vpop.xlane.xlu0 %1014
      %v1016 = vld [vmem:[%s9] sm:$0xff]
      %v1017 = vld [vmem:[%s9 + $0x8] sm:$0xff]
      %vm1018 = vcmp.eq.s32.totalorder %v1011, 0
      %v1019 = vsel %vm1018, %v1015, 0.0
      %vm1020 = vcmask 130048
      %v1022 = vsel %vm1020, %v463, 0
      %1024 = vmatprep.subr.mxu0 0.0
      %1025 = vmatpush1.msra.mxu0 0.0
      %1026 = vmatprep.subr.mxu0 0.0
      %1027 = vmatpush1.msra.mxu0 0.0
      %1028 = vmatprep.subr.mxu0 0.0
      %1029 = vmatpush1.msra.mxu0 0.0
      %1030 = vmatprep.subr.mxu0 0.0
      %1031 = vmatpush1.msra.mxu0 0.0
      %1032 = vmatprep.subr.mxu0 0.0
      %1033 = vmatpush1.msra.mxu0 0.0
      %1034 = vmatprep.subr.mxu0 0.0
      %1035 = vmatpush1.msra.mxu0 0.0
      %1036 = vmatprep.subr.mxu0 0.0
      %1037 = vmatpush1.msra.mxu0 0.0
      %1038 = vmatprep.subr.mxu0 0.0
      %1039 = vmatpush1.msra.mxu0 0.0
      %1040 = vmatprep.subr.mxu0 0.0
      %1041 = vmatpush1.msra.mxu0 0.0
      %1042 = vmatprep.subr.mxu0 0.0
      %1043 = vmatpush1.msra.mxu0 0.0
      %1044 = vmatprep.subr.mxu0 0.0
      %1045 = vmatpush1.msra.mxu0 0.0
      %1046 = vmatprep.subr.mxu0 0.0
      %1047 = vmatpush1.msra.mxu0 0.0
      %1048 = vmatprep.subr.mxu0 0.0
      %1049 = vmatpush1.msra.mxu0 0.0
      %1050 = vmatprep.subr.mxu0 0.0
      %1051 = vmatpush1.msra.mxu0 0.0
      %1052 = vmatprep.subr.mxu0 0.0
      %1053 = vmatpush1.msra.mxu0 %v1017
      %1054 = vmatprep.subr.mxu0 0.0
      %1055 = vmatpush1.msra.mxu0 %v1016
      %1056 = vmatprep.subr.mxu0 0.0
      %1057 = vmatpush2.msra.mxu0 0.0
      %1058 = vmatprep.subr.mxu0 0.0
      %1059 = vmatpush2.msra.mxu0 0.0
      %1060 = vmatprep.subr.mxu0 0.0
      %1061 = vmatpush2.msra.mxu0 0.0
      %1062 = vmatprep.subr.mxu0 0.0
      %1063 = vmatpush2.msra.mxu0 0.0
      %1064 = vmatprep.subr.mxu0 0.0
      %1065 = vmatpush2.msra.mxu0 0.0
      %1066 = vmatprep.subr.mxu0 0.0
      %1067 = vmatpush2.msra.mxu0 0.0
      %1068 = vmatprep.subr.mxu0 0.0
      %1069 = vmatpush2.msra.mxu0 0.0
      %1070 = vmatprep.subr.mxu0 0.0
      %1071 = vmatpush2.msra.mxu0 0.0
      %1072 = vmatprep.subr.mxu0 0.0
      %1073 = vmatpush2.msra.mxu0 0.0
      %1074 = vmatprep.subr.mxu0 0.0
      %1075 = vmatpush2.msra.mxu0 0.0
      %1076 = vmatprep.subr.mxu0 0.0
      %1077 = vmatpush2.msra.mxu0 0.0
      %1078 = vmatprep.subr.mxu0 0.0
      %1079 = vmatpush2.msra.mxu0 0.0
      %1080 = vmatprep.subr.mxu0 0.0
      %1081 = vmatpush2.msra.mxu0 0.0
      %1082 = vmatprep.subr.mxu0 0.0
      %1083 = vmatpush2.msra.mxu0 0.0
      %1084 = vmatprep.subr.mxu0 0.0
      %1085 = vmatpush2.msra.mxu0 0.0
      %1086 = vmatprep.subr.mxu0 0.0
      %1087 = vmatpush2.msra.mxu0 0.0
      %1088 = vmatprep.mubr.f32.mxu0 0.0
      %1089 = vmatmul.mubr.f32.gmra.mxu0 %v1022
      %v1090 = vpop.f32.mrf.mxu0
      %v1091 = vadd.f32 %v1019, %v1090
      %v1092 = vpop.f32.mrf.mxu0
      %1093 = vdwg.mxu0
      %v1094 = vmul.f32 %v1091, 14.285714
      %1095 = vst [vmem:[#allocation9] sm:$0x3] %v1094
      %vm1096 = vcmp.ge.s32.totalorder %v1011, 1
      %vm1097 = vcmp.le.s32.totalorder %v1011, 64
      %vm1098 = vmand %vm1096, %vm1097
      %v1099 = vlaneseq
      %v1100 = vshrl.u32 %v1099, 7
      %vm1101 = vcmp.eq.s32.totalorder %v1100, 0
      %s1102 = sld [smem:[#allocation5]]
      %v1103 = vstv %s1102
      %v1104 = vsel %vm1101, %v1103, 0
      %vm1105 = vcmp.eq.s32.totalorder %v1100, 1
      %s1106 = sld [smem:[#allocation5 + $0x1]]
      %v1107 = vstv %s1106
      %v1108 = vsel %vm1105, %v1107, %v1104
      %v1109 = vld [vmem:[%s11] sm:$0x1]
      %v1110 = vlaneseq
      %v1111 = vshrl.u32 %v1110, 7
      %v1112 = vsub.s32 0, %v1111
      %v1113 = vrot.slane %v1109, %v1112
      %vm1114 = vcmp.eq.s32.totalorder %v1113, %v1108
      %vm1115 = vmand %vm1114, %vm1098
      %vm1116 = vmxor %vm1115, 1
      %vm1117 = vmand %vm1098, %vm1116
      %v1118 = vld [vmem:[%s10] sm:$0xff]
      %v1119 = vld [vmem:[%s10 + $0x8] sm:$0xff]
      %v1121 = vsel %vm1020, %v1009, 0
      %1123 = vmatprep.subr.mxu0 0.0
      %1124 = vmatpush1.msra.mxu0 0.0
      %1125 = vmatprep.subr.mxu0 0.0
      %1126 = vmatpush1.msra.mxu0 0.0
      %1127 = vmatprep.subr.mxu0 0.0
      %1128 = vmatpush1.msra.mxu0 0.0
      %1129 = vmatprep.subr.mxu0 0.0
      %1130 = vmatpush1.msra.mxu0 0.0
      %1131 = vmatprep.subr.mxu0 0.0
      %1132 = vmatpush1.msra.mxu0 0.0
      %1133 = vmatprep.subr.mxu0 0.0
      %1134 = vmatpush1.msra.mxu0 0.0
      %1135 = vmatprep.subr.mxu0 0.0
      %1136 = vmatpush1.msra.mxu0 0.0
      %1137 = vmatprep.subr.mxu0 0.0
      %1138 = vmatpush1.msra.mxu0 0.0
      %1139 = vmatprep.subr.mxu0 0.0
      %1140 = vmatpush1.msra.mxu0 0.0
      %1141 = vmatprep.subr.mxu0 0.0
      %1142 = vmatpush1.msra.mxu0 0.0
      %1143 = vmatprep.subr.mxu0 0.0
      %1144 = vmatpush1.msra.mxu0 0.0
      %1145 = vmatprep.subr.mxu0 0.0
      %1146 = vmatpush1.msra.mxu0 0.0
      %1147 = vmatprep.subr.mxu0 0.0
      %1148 = vmatpush1.msra.mxu0 0.0
      %1149 = vmatprep.subr.mxu0 0.0
      %1150 = vmatpush1.msra.mxu0 0.0
      %1151 = vmatprep.subr.mxu0 0.0
      %1152 = vmatpush1.msra.mxu0 %v1119
      %1153 = vmatprep.subr.mxu0 0.0
      %1154 = vmatpush1.msra.mxu0 %v1118
      %1155 = vmatprep.subr.mxu0 0.0
      %1156 = vmatpush2.msra.mxu0 0.0
      %1157 = vmatprep.subr.mxu0 0.0
      %1158 = vmatpush2.msra.mxu0 0.0
      %1159 = vmatprep.subr.mxu0 0.0
      %1160 = vmatpush2.msra.mxu0 0.0
      %1161 = vmatprep.subr.mxu0 0.0
      %1162 = vmatpush2.msra.mxu0 0.0
      %1163 = vmatprep.subr.mxu0 0.0
      %1164 = vmatpush2.msra.mxu0 0.0
      %1165 = vmatprep.subr.mxu0 0.0
      %1166 = vmatpush2.msra.mxu0 0.0
      %1167 = vmatprep.subr.mxu0 0.0
      %1168 = vmatpush2.msra.mxu0 0.0
      %1169 = vmatprep.subr.mxu0 0.0
      %1170 = vmatpush2.msra.mxu0 0.0
      %1171 = vmatprep.subr.mxu0 0.0
      %1172 = vmatpush2.msra.mxu0 0.0
      %1173 = vmatprep.subr.mxu0 0.0
      %1174 = vmatpush2.msra.mxu0 0.0
      %1175 = vmatprep.subr.mxu0 0.0
      %1176 = vmatpush2.msra.mxu0 0.0
      %1177 = vmatprep.subr.mxu0 0.0
      %1178 = vmatpush2.msra.mxu0 0.0
      %1179 = vmatprep.subr.mxu0 0.0
      %1180 = vmatpush2.msra.mxu0 0.0
      %1181 = vmatprep.subr.mxu0 0.0
      %1182 = vmatpush2.msra.mxu0 0.0
      %1183 = vmatprep.subr.mxu0 0.0
      %1184 = vmatpush2.msra.mxu0 0.0
      %1185 = vmatprep.subr.mxu0 0.0
      %1186 = vmatpush2.msra.mxu0 0.0
      %1187 = vmatprep.mubr.f32.mxu0 0.0
      %1188 = vmatmul.mubr.f32.gmra.mxu0 %v1121
      %v1189 = vpop.f32.mrf.mxu0
      %v1190 = vadd.f32 0.0, %v1189
      %v1191 = vpop.f32.mrf.mxu0
      %1192 = vdwg.mxu0
      %v1193 = vsel %vm1117, %v1190, -inf
      %s1194 = sld [smem:[#allocation4]]
      %vm1195 = vcmask 1041408
      %v1196 = vsel %vm1195, %v1193, -inf
      %1197 = vmax.xlane.f32.xlu0 %v1196
      %v1198 = vpop.xlane.xlu0 %1197
      %vm1199 = vcmp.eq.f32.partialorder %v1193, %v1198
      %v1200 = vsel %vm1199, %v1011, 128
      %v1201 = vsel %vm1195, %v1200, 2147483647
      %v1202 = vand.u32 %v1201, 65535
      %v1203 = vshra.s32 %v1201, 16
      %v1204 = vcvt.s32.f32 %v1202
      %v1205 = vcvt.s32.f32 %v1203
      %1206 = vmin.xlane.f32.xlu0 %v1205
      %v1207 = vpop.xlane.xlu0 %1206
      %vm1208 = vcmp.eq.f32.partialorder %v1205, %v1207
      %v1209 = vsel %vm1208, %v1204, inf
      %1210 = vmin.xlane.f32.xlu0 %v1209
      %v1211 = vpop.xlane.xlu0 %1210
      %v1212 = vcvt.f32.s32 %v1211
      %v1213 = vcvt.f32.s32 %v1207
      %v1214 = vshll.u32 %v1213, 16
      %v1215 = vadd.s32 %v1214, %v1212
      %vm1216 = vcmp.eq.s32.totalorder %v1011, %v1215
      %p1217 = scmp.gt.s32.totalorder %s1194, 0
      %s1218 = scalar_select %p1217, 1, 0
      %v1219 = vstv %s1218
      %vm1220 = vcmp.eq.s32.totalorder %v1219, 1
      %vm1221 = vmand %vm1216, %vm1220
      %v1222 = vsel %vm1221, -inf, %v1193
      %v1223 = vsel %vm1195, %v1222, -inf
      %1224 = vmax.xlane.f32.xlu0 %v1223
      %v1225 = vpop.xlane.xlu0 %1224
      %vm1226 = vcmp.eq.f32.partialorder %v1222, %v1225
      %v1227 = vsel %vm1226, %v1011, 128
      %v1228 = vsel %vm1195, %v1227, 2147483647
      %v1229 = vand.u32 %v1228, 65535
      %v1230 = vshra.s32 %v1228, 16
      %v1231 = vcvt.s32.f32 %v1229
      %v1232 = vcvt.s32.f32 %v1230
      %1233 = vmin.xlane.f32.xlu0 %v1232
      %v1234 = vpop.xlane.xlu0 %1233
      %vm1235 = vcmp.eq.f32.partialorder %v1232, %v1234
      %v1236 = vsel %vm1235, %v1231, inf
      %1237 = vmin.xlane.f32.xlu0 %v1236
      %v1238 = vpop.xlane.xlu0 %1237
      %v1239 = vcvt.f32.s32 %v1238
      %v1240 = vcvt.f32.s32 %v1234
      %v1241 = vshll.u32 %v1240, 16
      %v1242 = vadd.s32 %v1241, %v1239
      %vm1243 = vcmp.eq.s32.totalorder %v1011, %v1242
      %p1244 = scmp.gt.s32.totalorder %s1194, 1
      %s1245 = scalar_select %p1244, 1, 0
      %v1246 = vstv %s1245
      %vm1247 = vcmp.eq.s32.totalorder %v1246, 1
      %vm1248 = vmand %vm1243, %vm1247
      %v1249 = vsel %vm1248, -inf, %v1222
      %v1250 = vsel %vm1195, %v1249, -inf
      %1251 = vmax.xlane.f32.xlu0 %v1250
      %v1252 = vpop.xlane.xlu0 %1251
      %vm1253 = vcmp.eq.f32.partialorder %v1249, %v1252
      %v1254 = vsel %vm1253, %v1011, 128
      %v1255 = vsel %vm1195, %v1254, 2147483647
      %v1256 = vand.u32 %v1255, 65535
      %v1257 = vshra.s32 %v1255, 16
      %v1258 = vcvt.s32.f32 %v1256
      %v1259 = vcvt.s32.f32 %v1257
      %1260 = vmin.xlane.f32.xlu0 %v1259
      %v1261 = vpop.xlane.xlu0 %1260
      %vm1262 = vcmp.eq.f32.partialorder %v1259, %v1261
      %v1263 = vsel %vm1262, %v1258, inf
      %1264 = vmin.xlane.f32.xlu0 %v1263
      %v1265 = vpop.xlane.xlu0 %1264
      %v1266 = vcvt.f32.s32 %v1265
      %v1267 = vcvt.f32.s32 %v1261
      %v1268 = vshll.u32 %v1267, 16
      %v1269 = vadd.s32 %v1268, %v1266
      %vm1270 = vcmp.eq.s32.totalorder %v1011, %v1269
      %p1271 = scmp.gt.s32.totalorder %s1194, 2
      %s1272 = scalar_select %p1271, 1, 0
      %v1273 = vstv %s1272
      %vm1274 = vcmp.eq.s32.totalorder %v1273, 1
      %vm1275 = vmand %vm1270, %vm1274
      %v1276 = vsel %vm1275, -inf, %v1249
      %vm1277 = vcmp.eq.f32.partialorder %v1276, -inf
      %vm1278 = vmand %vm1277, %vm1117
      %vm1279 = vmor %vm1115, %vm1278
      %v1280 = vsel %vm1279, 1, 0
      %v1281 = vsel %vm1018, 1, %v1280
      %1282 = vst [vmem:[#allocation10] sm:$0x3] %v1281
    $region61: #{tpu_custom_call.1} parent=1 // pred_fallthru
      _
    // Predicated region
    $region62: #{tpu_custom_call.1} parent=1 // pred_check
      _
    $region63: #{tpu_custom_call.1} parent=1 // pred_check_branch
      %1284 = sbr.rel (0) target = $region65
    $region64: #{tpu_custom_call.1} parent=1 // pred_region
      %s1286 = ssub.s32 32, 32
      %1287 = vsyncadd [#allocation8], %s1286
      %s1289 = sshll.u32 [#allocation9], 4
      %s1290 = int_to_ptr.vmem [resolvable:$true] %s1289
      %1292 = dma.vmem_to_hbm [thread:$0]  %s1290, 32, %s14, [#allocation8]
    $region65: #{tpu_custom_call.1} parent=1 // pred_fallthru
      _
    // Predicated region
    $region66: #{tpu_custom_call.1} parent=1 // pred_check
      _
    $region67: #{tpu_custom_call.1} parent=1 // pred_check_branch
      %1294 = sbr.rel (0) target = $region69
    $region68: #{tpu_custom_call.1} parent=1 // pred_region
      %s1296 = ssub.s32 32, 32
      %1297 = vsyncadd [#allocation11], %s1296
      %s1299 = sshll.u32 [#allocation10], 4
      %s1300 = int_to_ptr.vmem [resolvable:$true] %s1299
      %1302 = dma.vmem_to_hbm [thread:$0]  %s1300, 32, %s15, [#allocation11]
    $region69: #{tpu_custom_call.1} parent=1 // pred_fallthru
      _
    // Predicated region
    $region70: #{tpu_custom_call.1} parent=1 // pred_check
      _
    $region71: #{tpu_custom_call.1} parent=1 // pred_check_branch
      %1304 = sbr.rel (0) target = $region73
    $region72: #{tpu_custom_call.1} parent=1 // pred_region
      %1305 = dma.done [#allocation8], 32
    $region73: #{tpu_custom_call.1} parent=1 // pred_fallthru
      _
    // Predicated region
    $region74: #{tpu_custom_call.1} parent=1 // pred_check
      _
    $region75: #{tpu_custom_call.1} parent=1 // pred_check_branch
      %1307 = sbr.rel (0) target = $region77
    $region76: #{tpu_custom_call.1} parent=1 // pred_region
      %1308 = dma.done [#allocation11], 32
    $region77: #{tpu_custom_call.1} parent=1 // pred_fallthru
      _
    %1309 = vsyncpa [#allocation7], 1
    %1310 = vsyncpa [#allocation8], 1
    %1311 = vsyncpa [#allocation11], 1

</llo_original>
